<compile_context>
chip_gen: v6e
topology: v6e:2x2x1
jax: 0.10.0
libtpu: 0.0.40
codegen_flags: <defaults>
</compile_context>

<pallas_src>
import functools

import numpy as np

import jax
import jax.numpy as jnp
from jax.experimental import pallas as pl
from jax.experimental.pallas import tpu as pltpu


# --------------------------------------------------------------------------
# Kernels
# --------------------------------------------------------------------------
def _ssim_map_and_sum(mu_x, mu_y, m_xx, m_yy, m_xy, c1, c2):
    sigma_x = m_xx - mu_x * mu_x
    sigma_y = m_yy - mu_y * mu_y
    sigma_xy = m_xy - mu_x * mu_y
    num = (2.0 * mu_x * mu_y + c1) * (2.0 * sigma_xy + c2)
    den = (mu_x * mu_x + mu_y * mu_y + c1) * (sigma_x + sigma_y + c2)
    return jnp.sum(num / den)


def _ssim_kernel_fused(x_ref, y_ref, kt_ref, out_ref, *, c1, c2):
    """Lane-dense path: blocks are (1, B, H*W); both pool stages fused into
    one (B, H*W) @ kron(Ph, Pw)^T matmul per statistic."""
    x = x_ref[0].astype(jnp.float32)          # (B, H*W)
    y = y_ref[0].astype(jnp.float32)          # (B, H*W)
    kt = kt_ref[...]                          # (H*W, Ho*Wo), f32, resident

    def pool(a):                              # flat 2D dot, large-M on the MXU
        return jnp.dot(a, kt, preferred_element_type=jnp.float32)

    mu_x = pool(x)
    mu_y = pool(y)
    m_xx = pool(x * x)
    m_yy = pool(y * y)
    m_xy = pool(x * y)

    s = _ssim_map_and_sum(mu_x, mu_y, m_xx, m_yy, m_xy, c1, c2)
    out_ref[...] = jnp.broadcast_to(s, (1, 8, 1))


def _ssim_kernel_two_stage(x_ref, y_ref, pwt_ref, ph_ref, out_ref, *, c1, c2):
    """Large-image path: blocks are (1, B, H, W); W-pool then H-pool per
    statistic (no concat, pooling matrices broadcast once and reused)."""
    x = x_ref[0].astype(jnp.float32)          # (B, H, W)
    y = y_ref[0].astype(jnp.float32)          # (B, H, W)
    pwt = pwt_ref[...]                        # (W, Wo)
    ph = ph_ref[...]                          # (Ho, H)

    b, h, w = x.shape
    wo = pwt.shape[1]
    ho = ph.shape[0]

    # Hoisted once per grid step, shared by all five pooled statistics.
    pwt_b = jnp.broadcast_to(pwt[None], (b, w, wo))
    ph_b = jnp.broadcast_to(ph[None], (b, ho, h))

    def pool(a):                              # (B, H, W) -> (B, Ho, Wo)
        t = jnp.einsum("bhw,bwv->bhv", a, pwt_b,
                       preferred_element_type=jnp.float32)
        return jnp.einsum("boh,bhv->bov", ph_b, t,
                          preferred_element_type=jnp.float32)

    mu_x = pool(x)
    mu_y = pool(y)
    m_xx = pool(x * x)
    m_yy = pool(y * y)
    m_xy = pool(x * y)

    s = _ssim_map_and_sum(mu_x, mu_y, m_xx, m_yy, m_xy, c1, c2)
    out_ref[...] = jnp.broadcast_to(s, (1, 8, 1))


# --------------------------------------------------------------------------
# Wrapper helpers
# --------------------------------------------------------------------------
def _round_up(x, m):
    return -(-x // m) * m


def _pool_matrix_np(n, ws):
    """(n//ws, n) matrix with 1/ws in each window's columns (row-wise window mean)."""
    no = n // ws
    m = np.zeros((no, n), dtype=np.float32)
    for i in range(no):
        m[i, i * ws:(i + 1) * ws] = 1.0 / ws
    return m


def _vmem_limit_bytes():
    """Generation-aware VMEM budget: ~48 MiB on v7x (64 MiB VMEM/TC),
    up to 96 MiB on v5e/v6e (128 MiB VMEM)."""
    try:
        cap = int(pltpu.get_tpu_info().vmem_capacity_bytes)
    except Exception:
        cap = 64 << 20                         # conservative fallback
    return min(int(cap * 3 // 4), 96 << 20)


def _pick_batch(nc, block_elems, itemsize, const_bytes, budget_bytes,
                margin=4 << 20):
    """Largest divisor B of nc whose full working set fits the budget.
    Working set = 2 inputs x 2 pipeline buffers (native dtype)
                + ~8 f32 slice-equivalents of in-kernel intermediates
                + resident constants + margin.
    g = nc/B is kept >= 2 (and even when possible) so the pipeline and
    v7x dual-TensorCore sharding are actually used."""
    def cost(b):
        e = block_elems(b)
        return 2 * 2 * e * itemsize + 8 * e * 4 + const_bytes + margin

    divisors = [d for d in range(1, nc + 1) if nc % d == 0]
    max_b = nc if nc < 2 else nc // 2          # never degenerate to g == 1
    cand = [d for d in divisors if d <= max_b and cost(d) <= budget_bytes]
    if not cand:
        return 1
    even_g = [d for d in cand if (nc // d) % 2 == 0]
    return max(even_g if even_g else cand)


# --------------------------------------------------------------------------
# Public entry point
# --------------------------------------------------------------------------
def ssim_loss(x, y, window_size=11, data_range=1.0, block_slices=None,
              force_two_stage=False):
    """Pallas implementation of SSIMLoss.forward(x, y). x, y: (N, C, H, W)."""
    assert x.shape == y.shape and x.ndim == 4
    n, c, h, w = x.shape
    ws = int(window_size)
    ho, wo = h // ws, w // ws
    assert ho > 0 and wo > 0, "spatial dims must be >= window_size"
    nc = n * c
    itemsize = jnp.dtype(x.dtype).itemsize

    c1 = float((0.01 * data_range) ** 2)
    c2 = float((0.03 * data_range) ** 2)

    vmem_limit = _vmem_limit_bytes()

    hw, howo = h * w, ho * wo
    kron_padded_bytes = _round_up(hw, 8) * _round_up(howo, 128) * 4
    use_fused = (not force_two_stage) and kron_padded_bytes <= (8 << 20)

    if use_fused:
        const_bytes = 2 * kron_padded_bytes
        block_elems = lambda b: _round_up(b, 8) * _round_up(hw, 128)
    else:
        const_bytes = 2 * 4 * (_round_up(w, 8) * _round_up(wo, 128)
                               + _round_up(ho, 8) * _round_up(h, 128))
        block_elems = lambda b: b * _round_up(h, 8) * _round_up(w, 128)

    if block_slices is None:
        block_slices = _pick_batch(nc, block_elems, itemsize, const_bytes,
                                   vmem_limit)
    assert nc % block_slices == 0
    bs = block_slices
    g = nc // bs

    compiler_params = pltpu.CompilerParams(
        dimension_semantics=("parallel",),     # independent steps -> dual-TC on v7x
        vmem_limit_bytes=vmem_limit,
    )

    if use_fused:
        # Lane-dense layout: fold the spatial dims into the lane axis
        # (metadata-only reshape; data stays in native dtype in HBM).
        xr = x.reshape(g, bs, hw)
        yr = y.reshape(g, bs, hw)
        kt = jnp.asarray(
            np.kron(_pool_matrix_np(h, ws), _pool_matrix_np(w, ws)).T)  # (H*W, Ho*Wo)
        kernel = functools.partial(_ssim_kernel_fused, c1=c1, c2=c2)
        in_specs = [
            pl.BlockSpec((1, bs, hw), lambda i: (i, 0, 0)),             # x slices
            pl.BlockSpec((1, bs, hw), lambda i: (i, 0, 0)),             # y slices
            pl.BlockSpec((hw, howo), lambda i: (0, 0)),                 # kron (resident)
        ]
        operands = (xr, yr, kt)
    else:
        xr = x.reshape(g, bs, h, w)
        yr = y.reshape(g, bs, h, w)
        pwt = jnp.asarray(_pool_matrix_np(w, ws).T)                     # (W, Wo)
        ph = jnp.asarray(_pool_matrix_np(h, ws))                        # (Ho, H)
        kernel = functools.partial(_ssim_kernel_two_stage, c1=c1, c2=c2)
        in_specs = [
            pl.BlockSpec((1, bs, h, w), lambda i: (i, 0, 0, 0)),
            pl.BlockSpec((1, bs, h, w), lambda i: (i, 0, 0, 0)),
            pl.BlockSpec((w, wo), lambda i: (0, 0)),
            pl.BlockSpec((ho, h), lambda i: (0, 0)),
        ]
        operands = (xr, yr, pwt, ph)

    out = pl.pallas_call(
        kernel,
        out_shape=jax.ShapeDtypeStruct((g, 8, 1), jnp.float32),
        grid_spec=pltpu.PrefetchScalarGridSpec(
            num_scalar_prefetch=0,
            grid=(g,),
            in_specs=in_specs,
            out_specs=pl.BlockSpec((1, 8, 1), lambda i: (i, 0, 0)),     # partial sums
        ),
        compiler_params=compiler_params,
    )(*operands)

    partials = out[:, 0, 0]                    # (g,) per-step SSIM sums, f32
    return 1.0 - jnp.sum(partials) / float(nc * ho * wo)


# --------------------------------------------------------------------------
# Pure-JAX reference (mirrors the PyTorch module) for correctness checking
# --------------------------------------------------------------------------
def _ref_ssim_loss(x, y, window_size=11, data_range=1.0):
    c1 = (0.01 * data_range) ** 2
    c2 = (0.03 * data_range) ** 2
    n, c, h, w = x.shape
    ws = window_size
    ho, wo = h // ws, w // ws

    def pool(a):
        a = a[:, :, : ho * ws, : wo * ws].reshape(n, c, ho, ws, wo, ws)
        return a.mean(axis=(3, 5))

    mu_x, mu_y = pool(x), pool(y)
    sigma_x = pool(x * x) - mu_x ** 2
    sigma_y = pool(y * y) - mu_y ** 2
    sigma_xy = pool(x * y) - mu_x * mu_y
    ssim = (2 * mu_x * mu_y + c1) * (2 * sigma_xy + c2) / (
        (mu_x ** 2 + mu_y ** 2 + c1) * (sigma_x + sigma_y + c2)
    )
    return 1.0 - ssim.mean()


if __name__ == "__main__":
    keys = jax.random.split(jax.random.PRNGKey(0), 4)

    # Small NCHW inputs consistent with window_size=11 (pooled map is 3x3).
    x = jax.random.uniform(keys[0], (2, 4, 33, 33), dtype=jnp.float32)
    y = jax.random.uniform(keys[1], (2, 4, 33, 33), dtype=jnp.float32)

    loss = jax.block_until_ready(ssim_loss(x, y, window_size=11, data_range=1.0))
    ref = jax.block_until_ready(_ref_ssim_loss(x, y, window_size=11, data_range=1.0))
    assert jnp.isfinite(loss), "non-finite loss (fused path)"
    assert jnp.allclose(loss, ref, rtol=1e-4, atol=1e-5), (loss, ref)

    # Also exercise the two-stage (large-image) path once.
    x2 = jax.random.uniform(keys[2], (1, 4, 66, 88), dtype=jnp.float32)
    y2 = jax.random.uniform(keys[3], (1, 4, 66, 88), dtype=jnp.float32)
    loss2 = jax.block_until_ready(
        ssim_loss(x2, y2, window_size=11, data_range=1.0, force_two_stage=True))
    ref2 = jax.block_until_ready(
        _ref_ssim_loss(x2, y2, window_size=11, data_range=1.0))
    assert jnp.isfinite(loss2), "non-finite loss (two-stage path)"
    assert jnp.allclose(loss2, ref2, rtol=1e-4, atol=1e-5), (loss2, ref2)

    print("KERNEL_OK")
</pallas_src>

<mosaic_0001>
module attributes {stable_mosaic.version = 11 : i64} {
  func.func @_ssim_kernel_fused(%arg0: i32, %arg1: memref<1x4x1089xf32, #tpu.memory_space<vmem>>, %arg2: memref<1x4x1089xf32, #tpu.memory_space<vmem>>, %arg3: memref<1089x9xf32, #tpu.memory_space<vmem>>, %arg4: memref<1x8x1xf32, #tpu.memory_space<vmem>>) attributes {dimension_semantics = [#tpu.dimension_semantics<parallel>], iteration_bounds = array<i64: 2>, scalar_prefetch = 0 : i64, scratch_operands = 0 : i64, tpu.core_type = #tpu.core_type<tc>, window_params = [{transform_indices = @transform_0, window_bounds = array<i64: 1, 4, 1089>}, {transform_indices = @transform_1, window_bounds = array<i64: 1, 4, 1089>}, {pipeline_mode = #tpu.pipeline_mode<synchronous>, transform_indices = @transform_2, window_bounds = array<i64: 1089, 9>}, {transform_indices = @transform_3, window_bounds = array<i64: 1, 8, 1>}]} {
    %c0 = arith.constant 0 : index
    %c0_0 = arith.constant 0 : index
    %c0_1 = arith.constant 0 : index
    %0 = vector.load %arg1[%c0, %c0_0, %c0_1] : memref<1x4x1089xf32, #tpu.memory_space<vmem>>, vector<1x4x1089xf32>
    %1 = vector.shape_cast %0 : vector<1x4x1089xf32> to vector<4x1089xf32>
    %c0_2 = arith.constant 0 : index
    %c0_3 = arith.constant 0 : index
    %c0_4 = arith.constant 0 : index
    %2 = vector.load %arg2[%c0_2, %c0_3, %c0_4] : memref<1x4x1089xf32, #tpu.memory_space<vmem>>, vector<1x4x1089xf32>
    %3 = vector.shape_cast %2 : vector<1x4x1089xf32> to vector<4x1089xf32>
    %c0_5 = arith.constant 0 : index
    %c0_6 = arith.constant 0 : index
    %4 = vector.load %arg3[%c0_5, %c0_6] : memref<1089x9xf32, #tpu.memory_space<vmem>>, vector<1089x9xf32>
    %cst = arith.constant dense<0.000000e+00> : vector<4x9xf32>
    %5 = tpu.matmul %1, %4, %cst {dimension_numbers = #tpu.dot_dimension_numbers<[1], [0], [0], [1], [0, 0, 1, 1], [], []>} : vector<4x1089xf32>, vector<1089x9xf32>, vector<4x9xf32> -> vector<4x9xf32>
    %cst_7 = arith.constant dense<0.000000e+00> : vector<4x9xf32>
    %6 = tpu.matmul %3, %4, %cst_7 {dimension_numbers = #tpu.dot_dimension_numbers<[1], [0], [0], [1], [0, 0, 1, 1], [], []>} : vector<4x1089xf32>, vector<1089x9xf32>, vector<4x9xf32> -> vector<4x9xf32>
    %7 = arith.mulf %1, %1 : vector<4x1089xf32>
    %cst_8 = arith.constant dense<0.000000e+00> : vector<4x9xf32>
    %8 = tpu.matmul %7, %4, %cst_8 {dimension_numbers = #tpu.dot_dimension_numbers<[1], [0], [0], [1], [0, 0, 1, 1], [], []>} : vector<4x1089xf32>, vector<1089x9xf32>, vector<4x9xf32> -> vector<4x9xf32>
    %9 = arith.mulf %3, %3 : vector<4x1089xf32>
    %cst_9 = arith.constant dense<0.000000e+00> : vector<4x9xf32>
    %10 = tpu.matmul %9, %4, %cst_9 {dimension_numbers = #tpu.dot_dimension_numbers<[1], [0], [0], [1], [0, 0, 1, 1], [], []>} : vector<4x1089xf32>, vector<1089x9xf32>, vector<4x9xf32> -> vector<4x9xf32>
    %11 = arith.mulf %1, %3 : vector<4x1089xf32>
    %cst_10 = arith.constant dense<0.000000e+00> : vector<4x9xf32>
    %12 = tpu.matmul %11, %4, %cst_10 {dimension_numbers = #tpu.dot_dimension_numbers<[1], [0], [0], [1], [0, 0, 1, 1], [], []>} : vector<4x1089xf32>, vector<1089x9xf32>, vector<4x9xf32> -> vector<4x9xf32>
    %13 = arith.mulf %5, %5 : vector<4x9xf32>
    %14 = arith.subf %8, %13 : vector<4x9xf32>
    %15 = arith.mulf %6, %6 : vector<4x9xf32>
    %16 = arith.subf %10, %15 : vector<4x9xf32>
    %17 = arith.mulf %5, %6 : vector<4x9xf32>
    %18 = arith.subf %12, %17 : vector<4x9xf32>
    %cst_11 = arith.constant 2.000000e+00 : f32
    %19 = vector.broadcast %cst_11 : f32 to vector<4x9xf32>
    %20 = arith.mulf %19, %5 : vector<4x9xf32>
    %21 = arith.mulf %20, %6 : vector<4x9xf32>
    %cst_12 = arith.constant 9.99999974E-5 : f32
    %22 = vector.broadcast %cst_12 : f32 to vector<4x9xf32>
    %23 = arith.addf %21, %22 : vector<4x9xf32>
    %cst_13 = arith.constant 2.000000e+00 : f32
    %24 = vector.broadcast %cst_13 : f32 to vector<4x9xf32>
    %25 = arith.mulf %24, %18 : vector<4x9xf32>
    %cst_14 = arith.constant 8.99999984E-4 : f32
    %26 = vector.broadcast %cst_14 : f32 to vector<4x9xf32>
    %27 = arith.addf %25, %26 : vector<4x9xf32>
    %28 = arith.mulf %23, %27 : vector<4x9xf32>
    %29 = arith.mulf %5, %5 : vector<4x9xf32>
    %30 = arith.mulf %6, %6 : vector<4x9xf32>
    %31 = arith.addf %29, %30 : vector<4x9xf32>
    %cst_15 = arith.constant 9.99999974E-5 : f32
    %32 = vector.broadcast %cst_15 : f32 to vector<4x9xf32>
    %33 = arith.addf %31, %32 : vector<4x9xf32>
    %34 = arith.addf %14, %16 : vector<4x9xf32>
    %cst_16 = arith.constant 8.99999984E-4 : f32
    %35 = vector.broadcast %cst_16 : f32 to vector<4x9xf32>
    %36 = arith.addf %34, %35 : vector<4x9xf32>
    %37 = arith.mulf %33, %36 : vector<4x9xf32>
    %38 = arith.divf %28, %37 : vector<4x9xf32>
    %39 = vector.shape_cast %38 : vector<4x9xf32> to vector<1x4x9xf32>
    %cst_17 = arith.constant dense<0.000000e+00> : vector<1xf32>
    %40 = vector.multi_reduction <add>, %39, %cst_17 [1, 2] : vector<1x4x9xf32> to vector<1xf32>
    %41 = vector.shape_cast %40 : vector<1xf32> to vector<1x1x1xf32>
    %42 = vector.extract %41[0, 0, 0] : f32 from vector<1x1x1xf32>
    %43 = vector.broadcast %42 : f32 to vector<1x8x1xf32>
    %c0_18 = arith.constant 0 : index
    %c0_19 = arith.constant 0 : index
    %c0_20 = arith.constant 0 : index
    %44 = vector.load %arg4[%c0_18, %c0_19, %c0_20] : memref<1x8x1xf32, #tpu.memory_space<vmem>>, vector<1x8x1xf32>
    tpu.vector_store %arg4[%c0_18, %c0_19, %c0_20], %43 {strides = array<i32>} : memref<1x8x1xf32, #tpu.memory_space<vmem>>, vector<1x8x1xf32>,
    return
  }
  func.func @transform_0(%arg0: i32) -> (i32, i32, i32) {
    %c0_i32 = arith.constant 0 : i32
    %c0_i32_0 = arith.constant 0 : i32
    %c0_i32_1 = arith.constant 0 : i32
    return %arg0, %c0_i32, %c0_i32_0 : i32, i32, i32
  }
  func.func @transform_1(%arg0: i32) -> (i32, i32, i32) {
    %c0_i32 = arith.constant 0 : i32
    %c0_i32_0 = arith.constant 0 : i32
    %c0_i32_1 = arith.constant 0 : i32
    return %arg0, %c0_i32, %c0_i32_0 : i32, i32, i32
  }
  func.func @transform_2(%arg0: i32) -> (i32, i32) {
    %c0_i32 = arith.constant 0 : i32
    %c0_i32_0 = arith.constant 0 : i32
    %c0_i32_1 = arith.constant 0 : i32
    return %c0_i32, %c0_i32_0 : i32, i32
  }
  func.func @transform_3(%arg0: i32) -> (i32, i32, i32) {
    %c0_i32 = arith.constant 0 : i32
    %c0_i32_0 = arith.constant 0 : i32
    %c0_i32_1 = arith.constant 0 : i32
    return %arg0, %c0_i32, %c0_i32_0 : i32, i32, i32
  }
}

</mosaic_0001>

<llo_original>
// kernel: tpu_custom_call.1
$region0: #{tpu_custom_call.1}
  #allocation0 [shape = 'u32[]', space=smem, size = 0x4, offset = 0x4, fixed_abs, tag = 'smem constant byte address 0x4 - core index']
  #allocation1 [shape = 'u32[144,128]{1,0:T(1,128)}', space=vmem, size = 0x12000, scoped, tag = 'internal scratch']
  %s0 = inlined_call_operand.vmem [shape: f32[2,4,1089], index: 0, kind: input, shape index: {}]
  %s1 = inlined_call_operand.vmem [shape: f32[2,4,1089], index: 1, kind: input, shape index: {}]
  %s2 = inlined_call_operand.vmem [shape: f32[1089,9], index: 2, kind: input, shape index: {}]
  %s3 = inlined_call_operand.vmem [shape: f32[2,8,1], index: 3, kind: output, shape index: {}]
  %s4 = sld [smem:[#allocation0]]
  $region45: #{tpu_custom_call.1} parent=0
    _
  %s6 = ssub.s32 1, %s4
  %s7 = scalar_select 0, %s6, %s4
  loop: start=0, step=1, limit=4
  $region2: #{tpu_custom_call.1} parent=0 // loop_pre_header
    _
  $region3: #{tpu_custom_call.1} parent=0 // loop_header
    %s9 = sphi 0, %s13
    %p10 = scmp.ge.s32.totalorder %s9, 4
    %s19 = sphi 0, %s21
    %s22 = sphi 0, %s19
    %s23 = sphi 0, %s22
    %s39 = sphi 0, %s23
    %s45 = sphi 0, %s47
    %s48 = sphi 0, %s45
    %s49 = sphi 0, %s48
    %s65 = sphi 0, %s49
    %s69 = sphi 0, %s69
    %s71 = sphi 0, %s69
    %s72 = sphi 0, %s71
    %s86 = sphi 0, %s72
    %s92 = sphi 0, %s94
    %s95 = sphi 0, %s92
    %s96 = sphi 0, %s95
    %s112 = sphi 0, %s96
  $region4: #{tpu_custom_call.1} parent=0 // loop_header_branch
    %12 = sbr.rel (%p10) target = $region8
  $region5: #{tpu_custom_call.1} parent=0 // loop_body
    %s14 = ssub.s32 %s9, 1
    %s15 = ssub.s32 %s9, 2
    %s16 = sadd.s32 %s9, 1
    %s17 = ssub.s32 %s9, %s16
    %p18 = scmp.eq.s32.totalorder %s17, 0
    %s20 = sadd.s32 %s19, 1
    %s21 = scalar_select %p18, %s19, %s20
    %p24 = pneg %p18
    %p25 = scmp.eq.s32.totalorder %s9, 1
    %p26 = por %p24, %p25
    %p27 = scmp.ne.s32.totalorder %s19, %s22
    %p28 = scmp.eq.s32.totalorder %s9, 0
    %p29 = por %p27, %p28
    %p30 = scmp.ne.s32.totalorder %s19, %s22
    %p31 = scmp.eq.s32.totalorder %s14, 1
    %p32 = por %p30, %p31
    %p33 = scmp.ne.s32.totalorder %s22, %s23
    %p34 = scmp.eq.s32.totalorder %s14, 0
    %p35 = por %p33, %p34
    %p36 = scmp.ne.s32.totalorder %s22, %s23
    %p37 = scmp.eq.s32.totalorder %s15, 1
    %p38 = por %p36, %p37
    %p40 = scmp.ne.s32.totalorder %s23, %s39
    %p41 = scmp.eq.s32.totalorder %s15, 0
    %p42 = por %p40, %p41
    %s43 = ssub.s32 %s9, %s16
    %p44 = scmp.eq.s32.totalorder %s43, 0
    %s46 = sadd.s32 %s45, 1
    %s47 = scalar_select %p44, %s45, %s46
    %p50 = pneg %p44
    %p51 = scmp.eq.s32.totalorder %s9, 1
    %p52 = por %p50, %p51
    %p53 = scmp.ne.s32.totalorder %s45, %s48
    %p54 = scmp.eq.s32.totalorder %s9, 0
    %p55 = por %p53, %p54
    %p56 = scmp.ne.s32.totalorder %s45, %s48
    %p57 = scmp.eq.s32.totalorder %s14, 1
    %p58 = por %p56, %p57
    %p59 = scmp.ne.s32.totalorder %s48, %s49
    %p60 = scmp.eq.s32.totalorder %s14, 0
    %p61 = por %p59, %p60
    %p62 = scmp.ne.s32.totalorder %s48, %s49
    %p63 = scmp.eq.s32.totalorder %s15, 1
    %p64 = por %p62, %p63
    %p66 = scmp.ne.s32.totalorder %s49, %s65
    %p67 = scmp.eq.s32.totalorder %s15, 0
    %p68 = por %p66, %p67
    %s70 = sadd.s32 %s69, 1
    %p73 = scmp.eq.s32.totalorder %s9, 1
    %p74 = scmp.ne.s32.totalorder %s69, %s71
    %p75 = scmp.eq.s32.totalorder %s9, 0
    %p76 = por %p74, %p75
    %p77 = scmp.ne.s32.totalorder %s69, %s71
    %p78 = scmp.eq.s32.totalorder %s14, 1
    %p79 = por %p77, %p78
    %p80 = scmp.ne.s32.totalorder %s71, %s72
    %p81 = scmp.eq.s32.totalorder %s14, 0
    %p82 = por %p80, %p81
    %p83 = scmp.ne.s32.totalorder %s71, %s72
    %p84 = scmp.eq.s32.totalorder %s15, 1
    %p85 = por %p83, %p84
    %p87 = scmp.ne.s32.totalorder %s72, %s86
    %p88 = scmp.eq.s32.totalorder %s15, 0
    %p89 = por %p87, %p88
    %s90 = ssub.s32 %s9, %s16
    %p91 = scmp.eq.s32.totalorder %s90, 0
    %s93 = sadd.s32 %s92, 1
    %s94 = scalar_select %p91, %s92, %s93
    %p97 = pneg %p91
    %p98 = scmp.eq.s32.totalorder %s9, 1
    %p99 = por %p97, %p98
    %p100 = scmp.ne.s32.totalorder %s92, %s95
    %p101 = scmp.eq.s32.totalorder %s9, 0
    %p102 = por %p100, %p101
    %p103 = scmp.ne.s32.totalorder %s92, %s95
    %p104 = scmp.eq.s32.totalorder %s14, 1
    %p105 = por %p103, %p104
    %p106 = scmp.ne.s32.totalorder %s95, %s96
    %p107 = scmp.eq.s32.totalorder %s14, 0
    %p108 = por %p106, %p107
    %p109 = scmp.ne.s32.totalorder %s95, %s96
    %p110 = scmp.eq.s32.totalorder %s15, 1
    %p111 = por %p109, %p110
    %p113 = scmp.ne.s32.totalorder %s96, %s112
    %p114 = scmp.eq.s32.totalorder %s15, 0
    %p115 = por %p113, %p114
    %p116 = scmp.le.s32.totalorder 1, %s9
    %p117 = scmp.lt.s32.totalorder %s9, 3
    %p118 = pnand %p116, %p117
    %p119 = pneg %p118
    // Predicated region
    $region9: #{tpu_custom_call.1} parent=5 // pred_check
      _
    $region10: #{tpu_custom_call.1} parent=5 // pred_check_branch
      %121 = sbr.rel (%p118) target = $region12
    $region11: #{tpu_custom_call.1} parent=5 // pred_region
      %s122 = ssub.s32 %s9, 1
      // Predicated region
      $region13: #{tpu_custom_call.1} parent=11 // pred_check
        %p123 = pneg %p82
      $region14: #{tpu_custom_call.1} parent=11 // pred_check_branch
        %125 = sbr.rel (%p123) target = $region16
      $region15: #{tpu_custom_call.1} parent=11 // pred_region
        _
      $region16: #{tpu_custom_call.1} parent=11 // pred_fallthru
        _
    $region12: #{tpu_custom_call.1} parent=5 // pred_fallthru
      _
    %p126 = scmp.lt.s32.totalorder %s9, 2
    // Predicated region
    $region17: #{tpu_custom_call.1} parent=5 // pred_check
      %p127 = pneg %p126
    $region18: #{tpu_custom_call.1} parent=5 // pred_check_branch
      %129 = sbr.rel (%p127) target = $region20
    $region19: #{tpu_custom_call.1} parent=5 // pred_region
      // Predicated region
      $region21: #{tpu_custom_call.1} parent=19 // pred_check
        %p130 = pneg %p29
      $region22: #{tpu_custom_call.1} parent=19 // pred_check_branch
        %132 = sbr.rel (%p130) target = $region24
      $region23: #{tpu_custom_call.1} parent=19 // pred_region
        %p133 = scmp.lt.s32.totalorder %s9, 1
        %s134 = scalar_select %p133, %s9, 1
        %s135 = smul.addr %s134, 9
        %s136 = smul.addr %s135, 4
        %s137 = scalar_lea.vmem %s0, %s136
      $region24: #{tpu_custom_call.1} parent=19 // pred_fallthru
        _
      // Predicated region
      $region25: #{tpu_custom_call.1} parent=19 // pred_check
        %p138 = pneg %p55
      $region26: #{tpu_custom_call.1} parent=19 // pred_check_branch
        %140 = sbr.rel (%p138) target = $region28
      $region27: #{tpu_custom_call.1} parent=19 // pred_region
        %p141 = scmp.lt.s32.totalorder %s9, 1
        %s142 = scalar_select %p141, %s9, 1
        %s143 = smul.addr %s142, 9
        %s144 = smul.addr %s143, 4
        %s145 = scalar_lea.vmem %s1, %s144
      $region28: #{tpu_custom_call.1} parent=19 // pred_fallthru
        _
    $region20: #{tpu_custom_call.1} parent=5 // pred_fallthru
      _
    %p146 = scmp.le.s32.totalorder 1, %s9
    %p147 = scmp.lt.s32.totalorder %s9, 3
    %p148 = pnand %p146, %p147
    %p149 = pneg %p148
    // Predicated region
    $region29: #{tpu_custom_call.1} parent=5 // pred_check
      _
    $region30: #{tpu_custom_call.1} parent=5 // pred_check_branch
      %151 = sbr.rel (%p148) target = $region32
    $region31: #{tpu_custom_call.1} parent=5 // pred_region
      %s152 = ssub.s32 %s9, 1
      %p153 = scmp.lt.s32.totalorder %s14, 1
      %s154 = scalar_select %p153, %s14, 1
      %s155 = smul.addr %s154, 9
      %s156 = smul.addr %s155, 4
      %s157 = scalar_lea.vmem %s0, %s156
      %p158 = pneg %p35
      %p159 = pneg %p32
      %p160 = scmp.lt.s32.totalorder %s14, 1
      %s161 = scalar_select %p160, %s14, 1
      %s162 = smul.addr %s161, 9
      %s163 = smul.addr %s162, 4
      %s164 = scalar_lea.vmem %s1, %s163
      %p165 = pneg %p61
      %p166 = pneg %p58
      %p167 = pneg %p82
      %p168 = pneg %p79
      %p169 = pneg %p108
      %p170 = pneg %p105
      %p171 = scmp.lt.s32.totalorder %s14, 1
      %s172 = scalar_select %p171, %s14, 1
      %s173 = smul.addr %s172, 8
      %s174 = scalar_lea.vmem %s3, %s173
      %p175 = scmp.lt.s32.totalorder %s14, 1
      %s176 = scalar_select %p175, %s14, 1
      %s177 = smul.addr %s176, 9
      %s178 = smul.addr %s177, 4
      %s179 = scalar_lea.vmem %s0, %s178
      %p180 = scmp.lt.s32.totalorder %s14, 1
      %s181 = scalar_select %p180, %s14, 1
      %s182 = smul.addr %s181, 9
      %s183 = smul.addr %s182, 4
      %s184 = scalar_lea.vmem %s1, %s183
      %p185 = scmp.lt.s32.totalorder %s14, 1
      %s186 = scalar_select %p185, %s14, 1
      %s187 = smul.addr %s186, 8
      %s188 = scalar_lea.vmem %s3, %s187
      %v189 = vld [vmem:[%s179] sm:$0xff]
      %v190 = vld [vmem:[%s179 + $0x8] sm:$0xff]
      %v191 = vld [vmem:[%s179 + $0x10] sm:$0xff]
      %v192 = vld [vmem:[%s179 + $0x18] sm:$0xff]
      %v193 = vld [vmem:[%s179 + $0x20] sm:$0xf]
      %v194 = vld [vmem:[%s184] sm:$0xff]
      %v195 = vld [vmem:[%s184 + $0x8] sm:$0xff]
      %v196 = vld [vmem:[%s184 + $0x10] sm:$0xff]
      %v197 = vld [vmem:[%s184 + $0x18] sm:$0xff]
      %v198 = vld [vmem:[%s184 + $0x20] sm:$0xf]
      %v199 = vld [vmem:[%s2] sm:$0xff]
      %v200 = vld [vmem:[%s2 + $0x8] sm:$0xff]
      %v201 = vld [vmem:[%s2 + $0x10] sm:$0xff]
      %v202 = vld [vmem:[%s2 + $0x18] sm:$0xff]
      %v203 = vld [vmem:[%s2 + $0x20] sm:$0xff]
      %v204 = vld [vmem:[%s2 + $0x28] sm:$0xff]
      %v205 = vld [vmem:[%s2 + $0x30] sm:$0xff]
      %v206 = vld [vmem:[%s2 + $0x38] sm:$0xff]
      %v207 = vld [vmem:[%s2 + $0x40] sm:$0xff]
      %v208 = vld [vmem:[%s2 + $0x48] sm:$0xff]
      %v209 = vld [vmem:[%s2 + $0x50] sm:$0xff]
      %v210 = vld [vmem:[%s2 + $0x58] sm:$0xff]
      %v211 = vld [vmem:[%s2 + $0x60] sm:$0xff]
      %v212 = vld [vmem:[%s2 + $0x68] sm:$0xff]
      %v213 = vld [vmem:[%s2 + $0x70] sm:$0xff]
      %v214 = vld [vmem:[%s2 + $0x78] sm:$0xff]
      %v215 = vld [vmem:[%s2 + $0x80] sm:$0xff]
      %v216 = vld [vmem:[%s2 + $0x88] sm:$0xff]
      %v217 = vld [vmem:[%s2 + $0x90] sm:$0xff]
      %v218 = vld [vmem:[%s2 + $0x98] sm:$0xff]
      %v219 = vld [vmem:[%s2 + $0xa0] sm:$0xff]
      %v220 = vld [vmem:[%s2 + $0xa8] sm:$0xff]
      %v221 = vld [vmem:[%s2 + $0xb0] sm:$0xff]
      %v222 = vld [vmem:[%s2 + $0xb8] sm:$0xff]
      %v223 = vld [vmem:[%s2 + $0xc0] sm:$0xff]
      %v224 = vld [vmem:[%s2 + $0xc8] sm:$0xff]
      %v225 = vld [vmem:[%s2 + $0xd0] sm:$0xff]
      %v226 = vld [vmem:[%s2 + $0xd8] sm:$0xff]
      %v227 = vld [vmem:[%s2 + $0xe0] sm:$0xff]
      %v228 = vld [vmem:[%s2 + $0xe8] sm:$0xff]
      %v229 = vld [vmem:[%s2 + $0xf0] sm:$0xff]
      %v230 = vld [vmem:[%s2 + $0xf8] sm:$0xff]
      %v231 = vld [vmem:[%s2 + $0x100] sm:$0xff]
      %v232 = vld [vmem:[%s2 + $0x108] sm:$0xff]
      %v233 = vld [vmem:[%s2 + $0x110] sm:$0xff]
      %v234 = vld [vmem:[%s2 + $0x118] sm:$0xff]
      %v235 = vld [vmem:[%s2 + $0x120] sm:$0xff]
      %v236 = vld [vmem:[%s2 + $0x128] sm:$0xff]
      %v237 = vld [vmem:[%s2 + $0x130] sm:$0xff]
      %v238 = vld [vmem:[%s2 + $0x138] sm:$0xff]
      %v239 = vld [vmem:[%s2 + $0x140] sm:$0xff]
      %v240 = vld [vmem:[%s2 + $0x148] sm:$0xff]
      %v241 = vld [vmem:[%s2 + $0x150] sm:$0xff]
      %v242 = vld [vmem:[%s2 + $0x158] sm:$0xff]
      %v243 = vld [vmem:[%s2 + $0x160] sm:$0xff]
      %v244 = vld [vmem:[%s2 + $0x168] sm:$0xff]
      %v245 = vld [vmem:[%s2 + $0x170] sm:$0xff]
      %v246 = vld [vmem:[%s2 + $0x178] sm:$0xff]
      %v247 = vld [vmem:[%s2 + $0x180] sm:$0xff]
      %v248 = vld [vmem:[%s2 + $0x188] sm:$0xff]
      %v249 = vld [vmem:[%s2 + $0x190] sm:$0xff]
      %v250 = vld [vmem:[%s2 + $0x198] sm:$0xff]
      %v251 = vld [vmem:[%s2 + $0x1a0] sm:$0xff]
      %v252 = vld [vmem:[%s2 + $0x1a8] sm:$0xff]
      %v253 = vld [vmem:[%s2 + $0x1b0] sm:$0xff]
      %v254 = vld [vmem:[%s2 + $0x1b8] sm:$0xff]
      %v255 = vld [vmem:[%s2 + $0x1c0] sm:$0xff]
      %v256 = vld [vmem:[%s2 + $0x1c8] sm:$0xff]
      %v257 = vld [vmem:[%s2 + $0x1d0] sm:$0xff]
      %v258 = vld [vmem:[%s2 + $0x1d8] sm:$0xff]
      %v259 = vld [vmem:[%s2 + $0x1e0] sm:$0xff]
      %v260 = vld [vmem:[%s2 + $0x1e8] sm:$0xff]
      %v261 = vld [vmem:[%s2 + $0x1f0] sm:$0xff]
      %v262 = vld [vmem:[%s2 + $0x1f8] sm:$0xff]
      %v263 = vld [vmem:[%s2 + $0x200] sm:$0xff]
      %v264 = vld [vmem:[%s2 + $0x208] sm:$0xff]
      %v265 = vld [vmem:[%s2 + $0x210] sm:$0xff]
      %v266 = vld [vmem:[%s2 + $0x218] sm:$0xff]
      %v267 = vld [vmem:[%s2 + $0x220] sm:$0xff]
      %v268 = vld [vmem:[%s2 + $0x228] sm:$0xff]
      %v269 = vld [vmem:[%s2 + $0x230] sm:$0xff]
      %v270 = vld [vmem:[%s2 + $0x238] sm:$0xff]
      %v271 = vld [vmem:[%s2 + $0x240] sm:$0xff]
      %v272 = vld [vmem:[%s2 + $0x248] sm:$0xff]
      %v273 = vld [vmem:[%s2 + $0x250] sm:$0xff]
      %v274 = vld [vmem:[%s2 + $0x258] sm:$0xff]
      %v275 = vld [vmem:[%s2 + $0x260] sm:$0xff]
      %v276 = vld [vmem:[%s2 + $0x268] sm:$0xff]
      %v277 = vld [vmem:[%s2 + $0x270] sm:$0xff]
      %v278 = vld [vmem:[%s2 + $0x278] sm:$0xff]
      %v279 = vld [vmem:[%s2 + $0x280] sm:$0xff]
      %v280 = vld [vmem:[%s2 + $0x288] sm:$0xff]
      %v281 = vld [vmem:[%s2 + $0x290] sm:$0xff]
      %v282 = vld [vmem:[%s2 + $0x298] sm:$0xff]
      %v283 = vld [vmem:[%s2 + $0x2a0] sm:$0xff]
      %v284 = vld [vmem:[%s2 + $0x2a8] sm:$0xff]
      %v285 = vld [vmem:[%s2 + $0x2b0] sm:$0xff]
      %v286 = vld [vmem:[%s2 + $0x2b8] sm:$0xff]
      %v287 = vld [vmem:[%s2 + $0x2c0] sm:$0xff]
      %v288 = vld [vmem:[%s2 + $0x2c8] sm:$0xff]
      %v289 = vld [vmem:[%s2 + $0x2d0] sm:$0xff]
      %v290 = vld [vmem:[%s2 + $0x2d8] sm:$0xff]
      %v291 = vld [vmem:[%s2 + $0x2e0] sm:$0xff]
      %v292 = vld [vmem:[%s2 + $0x2e8] sm:$0xff]
      %v293 = vld [vmem:[%s2 + $0x2f0] sm:$0xff]
      %v294 = vld [vmem:[%s2 + $0x2f8] sm:$0xff]
      %v295 = vld [vmem:[%s2 + $0x300] sm:$0xff]
      %v296 = vld [vmem:[%s2 + $0x308] sm:$0xff]
      %v297 = vld [vmem:[%s2 + $0x310] sm:$0xff]
      %v298 = vld [vmem:[%s2 + $0x318] sm:$0xff]
      %v299 = vld [vmem:[%s2 + $0x320] sm:$0xff]
      %v300 = vld [vmem:[%s2 + $0x328] sm:$0xff]
      %v301 = vld [vmem:[%s2 + $0x330] sm:$0xff]
      %v302 = vld [vmem:[%s2 + $0x338] sm:$0xff]
      %v303 = vld [vmem:[%s2 + $0x340] sm:$0xff]
      %v304 = vld [vmem:[%s2 + $0x348] sm:$0xff]
      %v305 = vld [vmem:[%s2 + $0x350] sm:$0xff]
      %v306 = vld [vmem:[%s2 + $0x358] sm:$0xff]
      %v307 = vld [vmem:[%s2 + $0x360] sm:$0xff]
      %v308 = vld [vmem:[%s2 + $0x368] sm:$0xff]
      %v309 = vld [vmem:[%s2 + $0x370] sm:$0xff]
      %v310 = vld [vmem:[%s2 + $0x378] sm:$0xff]
      %v311 = vld [vmem:[%s2 + $0x380] sm:$0xff]
      %v312 = vld [vmem:[%s2 + $0x388] sm:$0xff]
      %v313 = vld [vmem:[%s2 + $0x390] sm:$0xff]
      %v314 = vld [vmem:[%s2 + $0x398] sm:$0xff]
      %v315 = vld [vmem:[%s2 + $0x3a0] sm:$0xff]
      %v316 = vld [vmem:[%s2 + $0x3a8] sm:$0xff]
      %v317 = vld [vmem:[%s2 + $0x3b0] sm:$0xff]
      %v318 = vld [vmem:[%s2 + $0x3b8] sm:$0xff]
      %v319 = vld [vmem:[%s2 + $0x3c0] sm:$0xff]
      %v320 = vld [vmem:[%s2 + $0x3c8] sm:$0xff]
      %v321 = vld [vmem:[%s2 + $0x3d0] sm:$0xff]
      %v322 = vld [vmem:[%s2 + $0x3d8] sm:$0xff]
      %v323 = vld [vmem:[%s2 + $0x3e0] sm:$0xff]
      %v324 = vld [vmem:[%s2 + $0x3e8] sm:$0xff]
      %v325 = vld [vmem:[%s2 + $0x3f0] sm:$0xff]
      %v326 = vld [vmem:[%s2 + $0x3f8] sm:$0xff]
      %v327 = vld [vmem:[%s2 + $0x400] sm:$0xff]
      %v328 = vld [vmem:[%s2 + $0x408] sm:$0xff]
      %v329 = vld [vmem:[%s2 + $0x410] sm:$0xff]
      %v330 = vld [vmem:[%s2 + $0x418] sm:$0xff]
      %v331 = vld [vmem:[%s2 + $0x420] sm:$0xff]
      %v332 = vld [vmem:[%s2 + $0x428] sm:$0xff]
      %v333 = vld [vmem:[%s2 + $0x430] sm:$0xff]
      %v334 = vld [vmem:[%s2 + $0x438] sm:$0xff]
      %v335 = vld [vmem:[%s2 + $0x440] sm:$0x1]
      %v341 = vcombine.high %v189, %v189
      %v342 = vcombine.high %v190, %v190
      %v343 = vcombine.high %v191, %v191
      %v344 = vcombine.high %v192, %v192
      %vm349 = vcmask 531456
      %v350 = vsel %vm349, %v193, 0
      %vm352 = vcmask 1040384
      %v354 = vsel %vm352, %v335, 0
      %356 = vmatprep.subr.mxu0 0.0
      %357 = vmatpush1.msra.mxu0 %v214
      %358 = vmatprep.subr.mxu0 0.0
      %359 = vmatpush1.msra.mxu0 %v213
      %360 = vmatprep.subr.mxu0 0.0
      %361 = vmatpush1.msra.mxu0 %v212
      %362 = vmatprep.subr.mxu0 0.0
      %363 = vmatpush1.msra.mxu0 %v211
      %364 = vmatprep.subr.mxu0 0.0
      %365 = vmatpush1.msra.mxu0 %v210
      %366 = vmatprep.subr.mxu0 0.0
      %367 = vmatpush1.msra.mxu0 %v209
      %368 = vmatprep.subr.mxu0 0.0
      %369 = vmatpush1.msra.mxu0 %v208
      %370 = vmatprep.subr.mxu0 0.0
      %371 = vmatpush1.msra.mxu0 %v207
      %372 = vmatprep.subr.mxu0 0.0
      %373 = vmatpush1.msra.mxu0 %v206
      %374 = vmatprep.subr.mxu0 0.0
      %375 = vmatpush1.msra.mxu0 %v205
      %376 = vmatprep.subr.mxu0 0.0
      %377 = vmatpush1.msra.mxu0 %v204
      %378 = vmatprep.subr.mxu0 0.0
      %379 = vmatpush1.msra.mxu0 %v203
      %380 = vmatprep.subr.mxu0 0.0
      %381 = vmatpush1.msra.mxu0 %v202
      %382 = vmatprep.subr.mxu0 0.0
      %383 = vmatpush1.msra.mxu0 %v201
      %384 = vmatprep.subr.mxu0 0.0
      %385 = vmatpush1.msra.mxu0 %v200
      %386 = vmatprep.subr.mxu0 0.0
      %387 = vmatpush1.msra.mxu0 %v199
      %388 = vmatprep.subr.mxu0 0.0
      %389 = vmatpush2.msra.mxu0 %v230
      %390 = vmatprep.subr.mxu0 0.0
      %391 = vmatpush2.msra.mxu0 %v229
      %392 = vmatprep.subr.mxu0 0.0
      %393 = vmatpush2.msra.mxu0 %v228
      %394 = vmatprep.subr.mxu0 0.0
      %395 = vmatpush2.msra.mxu0 %v227
      %396 = vmatprep.subr.mxu0 0.0
      %397 = vmatpush2.msra.mxu0 %v226
      %398 = vmatprep.subr.mxu0 0.0
      %399 = vmatpush2.msra.mxu0 %v225
      %400 = vmatprep.subr.mxu0 0.0
      %401 = vmatpush2.msra.mxu0 %v224
      %402 = vmatprep.subr.mxu0 0.0
      %403 = vmatpush2.msra.mxu0 %v223
      %404 = vmatprep.subr.mxu0 0.0
      %405 = vmatpush2.msra.mxu0 %v222
      %406 = vmatprep.subr.mxu0 0.0
      %407 = vmatpush2.msra.mxu0 %v221
      %408 = vmatprep.subr.mxu0 0.0
      %409 = vmatpush2.msra.mxu0 %v220
      %410 = vmatprep.subr.mxu0 0.0
      %411 = vmatpush2.msra.mxu0 %v219
      %412 = vmatprep.subr.mxu0 0.0
      %413 = vmatpush2.msra.mxu0 %v218
      %414 = vmatprep.subr.mxu0 0.0
      %415 = vmatpush2.msra.mxu0 %v217
      %416 = vmatprep.subr.mxu0 0.0
      %417 = vmatpush2.msra.mxu0 %v216
      %418 = vmatprep.subr.mxu0 0.0
      %419 = vmatpush2.msra.mxu0 %v215
      %420 = vmatprep.mubr.f32.mxu0 %v341
      %421 = vmatmul.mubr.f32.gmra.mxu0 %v189
      %v422 = vpop.f32.mrf.mxu0
      %v423 = vadd.f32 0.0, %v422
      %v424 = vpop.f32.mrf.mxu0
      %425 = vdwg.mxu0
      %426 = vmatprep.subr.mxu0 0.0
      %427 = vmatpush1.msra.mxu0 %v246
      %428 = vmatprep.subr.mxu0 0.0
      %429 = vmatpush1.msra.mxu0 %v245
      %430 = vmatprep.subr.mxu0 0.0
      %431 = vmatpush1.msra.mxu0 %v244
      %432 = vmatprep.subr.mxu0 0.0
      %433 = vmatpush1.msra.mxu0 %v243
      %434 = vmatprep.subr.mxu0 0.0
      %435 = vmatpush1.msra.mxu0 %v242
      %436 = vmatprep.subr.mxu0 0.0
      %437 = vmatpush1.msra.mxu0 %v241
      %438 = vmatprep.subr.mxu0 0.0
      %439 = vmatpush1.msra.mxu0 %v240
      %440 = vmatprep.subr.mxu0 0.0
      %441 = vmatpush1.msra.mxu0 %v239
      %442 = vmatprep.subr.mxu0 0.0
      %443 = vmatpush1.msra.mxu0 %v238
      %444 = vmatprep.subr.mxu0 0.0
      %445 = vmatpush1.msra.mxu0 %v237
      %446 = vmatprep.subr.mxu0 0.0
      %447 = vmatpush1.msra.mxu0 %v236
      %448 = vmatprep.subr.mxu0 0.0
      %449 = vmatpush1.msra.mxu0 %v235
      %450 = vmatprep.subr.mxu0 0.0
      %451 = vmatpush1.msra.mxu0 %v234
      %452 = vmatprep.subr.mxu0 0.0
      %453 = vmatpush1.msra.mxu0 %v233
      %454 = vmatprep.subr.mxu0 0.0
      %455 = vmatpush1.msra.mxu0 %v232
      %456 = vmatprep.subr.mxu0 0.0
      %457 = vmatpush1.msra.mxu0 %v231
      %458 = vmatprep.subr.mxu0 0.0
      %459 = vmatpush2.msra.mxu0 %v262
      %460 = vmatprep.subr.mxu0 0.0
      %461 = vmatpush2.msra.mxu0 %v261
      %462 = vmatprep.subr.mxu0 0.0
      %463 = vmatpush2.msra.mxu0 %v260
      %464 = vmatprep.subr.mxu0 0.0
      %465 = vmatpush2.msra.mxu0 %v259
      %466 = vmatprep.subr.mxu0 0.0
      %467 = vmatpush2.msra.mxu0 %v258
      %468 = vmatprep.subr.mxu0 0.0
      %469 = vmatpush2.msra.mxu0 %v257
      %470 = vmatprep.subr.mxu0 0.0
      %471 = vmatpush2.msra.mxu0 %v256
      %472 = vmatprep.subr.mxu0 0.0
      %473 = vmatpush2.msra.mxu0 %v255
      %474 = vmatprep.subr.mxu0 0.0
      %475 = vmatpush2.msra.mxu0 %v254
      %476 = vmatprep.subr.mxu0 0.0
      %477 = vmatpush2.msra.mxu0 %v253
      %478 = vmatprep.subr.mxu0 0.0
      %479 = vmatpush2.msra.mxu0 %v252
      %480 = vmatprep.subr.mxu0 0.0
      %481 = vmatpush2.msra.mxu0 %v251
      %482 = vmatprep.subr.mxu0 0.0
      %483 = vmatpush2.msra.mxu0 %v250
      %484 = vmatprep.subr.mxu0 0.0
      %485 = vmatpush2.msra.mxu0 %v249
      %486 = vmatprep.subr.mxu0 0.0
      %487 = vmatpush2.msra.mxu0 %v248
      %488 = vmatprep.subr.mxu0 0.0
      %489 = vmatpush2.msra.mxu0 %v247
      %490 = vmatprep.mubr.f32.mxu0 %v342
      %491 = vmatmul.mubr.f32.gmra.mxu0 %v190
      %v492 = vpop.f32.mrf.mxu0
      %v493 = vadd.f32 %v423, %v492
      %v494 = vpop.f32.mrf.mxu0
      %495 = vdwg.mxu0
      %496 = vmatprep.subr.mxu0 0.0
      %497 = vmatpush1.msra.mxu0 %v278
      %498 = vmatprep.subr.mxu0 0.0
      %499 = vmatpush1.msra.mxu0 %v277
      %500 = vmatprep.subr.mxu0 0.0
      %501 = vmatpush1.msra.mxu0 %v276
      %502 = vmatprep.subr.mxu0 0.0
      %503 = vmatpush1.msra.mxu0 %v275
      %504 = vmatprep.subr.mxu0 0.0
      %505 = vmatpush1.msra.mxu0 %v274
      %506 = vmatprep.subr.mxu0 0.0
      %507 = vmatpush1.msra.mxu0 %v273
      %508 = vmatprep.subr.mxu0 0.0
      %509 = vmatpush1.msra.mxu0 %v272
      %510 = vmatprep.subr.mxu0 0.0
      %511 = vmatpush1.msra.mxu0 %v271
      %512 = vmatprep.subr.mxu0 0.0
      %513 = vmatpush1.msra.mxu0 %v270
      %514 = vmatprep.subr.mxu0 0.0
      %515 = vmatpush1.msra.mxu0 %v269
      %516 = vmatprep.subr.mxu0 0.0
      %517 = vmatpush1.msra.mxu0 %v268
      %518 = vmatprep.subr.mxu0 0.0
      %519 = vmatpush1.msra.mxu0 %v267
      %520 = vmatprep.subr.mxu0 0.0
      %521 = vmatpush1.msra.mxu0 %v266
      %522 = vmatprep.subr.mxu0 0.0
      %523 = vmatpush1.msra.mxu0 %v265
      %524 = vmatprep.subr.mxu0 0.0
      %525 = vmatpush1.msra.mxu0 %v264
      %526 = vmatprep.subr.mxu0 0.0
      %527 = vmatpush1.msra.mxu0 %v263
      %528 = vmatprep.subr.mxu0 0.0
      %529 = vmatpush2.msra.mxu0 %v294
      %530 = vmatprep.subr.mxu0 0.0
      %531 = vmatpush2.msra.mxu0 %v293
      %532 = vmatprep.subr.mxu0 0.0
      %533 = vmatpush2.msra.mxu0 %v292
      %534 = vmatprep.subr.mxu0 0.0
      %535 = vmatpush2.msra.mxu0 %v291
      %536 = vmatprep.subr.mxu0 0.0
      %537 = vmatpush2.msra.mxu0 %v290
      %538 = vmatprep.subr.mxu0 0.0
      %539 = vmatpush2.msra.mxu0 %v289
      %540 = vmatprep.subr.mxu0 0.0
      %541 = vmatpush2.msra.mxu0 %v288
      %542 = vmatprep.subr.mxu0 0.0
      %543 = vmatpush2.msra.mxu0 %v287
      %544 = vmatprep.subr.mxu0 0.0
      %545 = vmatpush2.msra.mxu0 %v286
      %546 = vmatprep.subr.mxu0 0.0
      %547 = vmatpush2.msra.mxu0 %v285
      %548 = vmatprep.subr.mxu0 0.0
      %549 = vmatpush2.msra.mxu0 %v284
      %550 = vmatprep.subr.mxu0 0.0
      %551 = vmatpush2.msra.mxu0 %v283
      %552 = vmatprep.subr.mxu0 0.0
      %553 = vmatpush2.msra.mxu0 %v282
      %554 = vmatprep.subr.mxu0 0.0
      %555 = vmatpush2.msra.mxu0 %v281
      %556 = vmatprep.subr.mxu0 0.0
      %557 = vmatpush2.msra.mxu0 %v280
      %558 = vmatprep.subr.mxu0 0.0
      %559 = vmatpush2.msra.mxu0 %v279
      %560 = vmatprep.mubr.f32.mxu0 %v343
      %561 = vmatmul.mubr.f32.gmra.mxu0 %v191
      %v562 = vpop.f32.mrf.mxu0
      %v563 = vadd.f32 %v493, %v562
      %v564 = vpop.f32.mrf.mxu0
      %565 = vdwg.mxu0
      %566 = vmatprep.subr.mxu0 0.0
      %567 = vmatpush1.msra.mxu0 %v310
      %568 = vmatprep.subr.mxu0 0.0
      %569 = vmatpush1.msra.mxu0 %v309
      %570 = vmatprep.subr.mxu0 0.0
      %571 = vmatpush1.msra.mxu0 %v308
      %572 = vmatprep.subr.mxu0 0.0
      %573 = vmatpush1.msra.mxu0 %v307
      %574 = vmatprep.subr.mxu0 0.0
      %575 = vmatpush1.msra.mxu0 %v306
      %576 = vmatprep.subr.mxu0 0.0
      %577 = vmatpush1.msra.mxu0 %v305
      %578 = vmatprep.subr.mxu0 0.0
      %579 = vmatpush1.msra.mxu0 %v304
      %580 = vmatprep.subr.mxu0 0.0
      %581 = vmatpush1.msra.mxu0 %v303
      %582 = vmatprep.subr.mxu0 0.0
      %583 = vmatpush1.msra.mxu0 %v302
      %584 = vmatprep.subr.mxu0 0.0
      %585 = vmatpush1.msra.mxu0 %v301
      %586 = vmatprep.subr.mxu0 0.0
      %587 = vmatpush1.msra.mxu0 %v300
      %588 = vmatprep.subr.mxu0 0.0
      %589 = vmatpush1.msra.mxu0 %v299
      %590 = vmatprep.subr.mxu0 0.0
      %591 = vmatpush1.msra.mxu0 %v298
      %592 = vmatprep.subr.mxu0 0.0
      %593 = vmatpush1.msra.mxu0 %v297
      %594 = vmatprep.subr.mxu0 0.0
      %595 = vmatpush1.msra.mxu0 %v296
      %596 = vmatprep.subr.mxu0 0.0
      %597 = vmatpush1.msra.mxu0 %v295
      %598 = vmatprep.subr.mxu0 0.0
      %599 = vmatpush2.msra.mxu0 %v326
      %600 = vmatprep.subr.mxu0 0.0
      %601 = vmatpush2.msra.mxu0 %v325
      %602 = vmatprep.subr.mxu0 0.0
      %603 = vmatpush2.msra.mxu0 %v324
      %604 = vmatprep.subr.mxu0 0.0
      %605 = vmatpush2.msra.mxu0 %v323
      %606 = vmatprep.subr.mxu0 0.0
      %607 = vmatpush2.msra.mxu0 %v322
      %608 = vmatprep.subr.mxu0 0.0
      %609 = vmatpush2.msra.mxu0 %v321
      %610 = vmatprep.subr.mxu0 0.0
      %611 = vmatpush2.msra.mxu0 %v320
      %612 = vmatprep.subr.mxu0 0.0
      %613 = vmatpush2.msra.mxu0 %v319
      %614 = vmatprep.subr.mxu0 0.0
      %615 = vmatpush2.msra.mxu0 %v318
      %616 = vmatprep.subr.mxu0 0.0
      %617 = vmatpush2.msra.mxu0 %v317
      %618 = vmatprep.subr.mxu0 0.0
      %619 = vmatpush2.msra.mxu0 %v316
      %620 = vmatprep.subr.mxu0 0.0
      %621 = vmatpush2.msra.mxu0 %v315
      %622 = vmatprep.subr.mxu0 0.0
      %623 = vmatpush2.msra.mxu0 %v314
      %624 = vmatprep.subr.mxu0 0.0
      %625 = vmatpush2.msra.mxu0 %v313
      %626 = vmatprep.subr.mxu0 0.0
      %627 = vmatpush2.msra.mxu0 %v312
      %628 = vmatprep.subr.mxu0 0.0
      %629 = vmatpush2.msra.mxu0 %v311
      %630 = vmatprep.mubr.f32.mxu0 %v344
      %631 = vmatmul.mubr.f32.gmra.mxu0 %v192
      %v632 = vpop.f32.mrf.mxu0
      %v633 = vadd.f32 %v563, %v632
      %v634 = vpop.f32.mrf.mxu0
      %635 = vdwg.mxu0
      %636 = vmatprep.subr.mxu0 0.0
      %637 = vmatpush1.msra.mxu0 0.0
      %638 = vmatprep.subr.mxu0 0.0
      %639 = vmatpush1.msra.mxu0 0.0
      %640 = vmatprep.subr.mxu0 0.0
      %641 = vmatpush1.msra.mxu0 0.0
      %642 = vmatprep.subr.mxu0 0.0
      %643 = vmatpush1.msra.mxu0 0.0
      %644 = vmatprep.subr.mxu0 0.0
      %645 = vmatpush1.msra.mxu0 0.0
      %646 = vmatprep.subr.mxu0 0.0
      %647 = vmatpush1.msra.mxu0 0.0
      %648 = vmatprep.subr.mxu0 0.0
      %649 = vmatpush1.msra.mxu0 0.0
      %650 = vmatprep.subr.mxu0 0.0
      %651 = vmatpush1.msra.mxu0 %v354
      %652 = vmatprep.subr.mxu0 0.0
      %653 = vmatpush1.msra.mxu0 %v334
      %654 = vmatprep.subr.mxu0 0.0
      %655 = vmatpush1.msra.mxu0 %v333
      %656 = vmatprep.subr.mxu0 0.0
      %657 = vmatpush1.msra.mxu0 %v332
      %658 = vmatprep.subr.mxu0 0.0
      %659 = vmatpush1.msra.mxu0 %v331
      %660 = vmatprep.subr.mxu0 0.0
      %661 = vmatpush1.msra.mxu0 %v330
      %662 = vmatprep.subr.mxu0 0.0
      %663 = vmatpush1.msra.mxu0 %v329
      %664 = vmatprep.subr.mxu0 0.0
      %665 = vmatpush1.msra.mxu0 %v328
      %666 = vmatprep.subr.mxu0 0.0
      %667 = vmatpush1.msra.mxu0 %v327
      %668 = vmatprep.subr.mxu0 0.0
      %669 = vmatpush2.msra.mxu0 0.0
      %670 = vmatprep.subr.mxu0 0.0
      %671 = vmatpush2.msra.mxu0 0.0
      %672 = vmatprep.subr.mxu0 0.0
      %673 = vmatpush2.msra.mxu0 0.0
      %674 = vmatprep.subr.mxu0 0.0
      %675 = vmatpush2.msra.mxu0 0.0
      %676 = vmatprep.subr.mxu0 0.0
      %677 = vmatpush2.msra.mxu0 0.0
      %678 = vmatprep.subr.mxu0 0.0
      %679 = vmatpush2.msra.mxu0 0.0
      %680 = vmatprep.subr.mxu0 0.0
      %681 = vmatpush2.msra.mxu0 0.0
      %682 = vmatprep.subr.mxu0 0.0
      %683 = vmatpush2.msra.mxu0 0.0
      %684 = vmatprep.subr.mxu0 0.0
      %685 = vmatpush2.msra.mxu0 0.0
      %686 = vmatprep.subr.mxu0 0.0
      %687 = vmatpush2.msra.mxu0 0.0
      %688 = vmatprep.subr.mxu0 0.0
      %689 = vmatpush2.msra.mxu0 0.0
      %690 = vmatprep.subr.mxu0 0.0
      %691 = vmatpush2.msra.mxu0 0.0
      %692 = vmatprep.subr.mxu0 0.0
      %693 = vmatpush2.msra.mxu0 0.0
      %694 = vmatprep.subr.mxu0 0.0
      %695 = vmatpush2.msra.mxu0 0.0
      %696 = vmatprep.subr.mxu0 0.0
      %697 = vmatpush2.msra.mxu0 0.0
      %698 = vmatprep.subr.mxu0 0.0
      %699 = vmatpush2.msra.mxu0 0.0
      %700 = vmatprep.mubr.f32.mxu0 0.0
      %701 = vmatmul.mubr.f32.gmra.mxu0 %v350
      %v702 = vpop.f32.mrf.mxu0
      %v703 = vadd.f32 %v633, %v702
      %v704 = vpop.f32.mrf.mxu0
      %705 = vdwg.mxu0
      %v711 = vcombine.high %v194, %v194
      %v712 = vcombine.high %v195, %v195
      %v713 = vcombine.high %v196, %v196
      %v714 = vcombine.high %v197, %v197
      %v719 = vsel %vm349, %v198, 0
      %721 = vmatprep.subr.mxu0 0.0
      %722 = vmatpush1.msra.mxu0 %v214
      %723 = vmatprep.subr.mxu0 0.0
      %724 = vmatpush1.msra.mxu0 %v213
      %725 = vmatprep.subr.mxu0 0.0
      %726 = vmatpush1.msra.mxu0 %v212
      %727 = vmatprep.subr.mxu0 0.0
      %728 = vmatpush1.msra.mxu0 %v211
      %729 = vmatprep.subr.mxu0 0.0
      %730 = vmatpush1.msra.mxu0 %v210
      %731 = vmatprep.subr.mxu0 0.0
      %732 = vmatpush1.msra.mxu0 %v209
      %733 = vmatprep.subr.mxu0 0.0
      %734 = vmatpush1.msra.mxu0 %v208
      %735 = vmatprep.subr.mxu0 0.0
      %736 = vmatpush1.msra.mxu0 %v207
      %737 = vmatprep.subr.mxu0 0.0
      %738 = vmatpush1.msra.mxu0 %v206
      %739 = vmatprep.subr.mxu0 0.0
      %740 = vmatpush1.msra.mxu0 %v205
      %741 = vmatprep.subr.mxu0 0.0
      %742 = vmatpush1.msra.mxu0 %v204
      %743 = vmatprep.subr.mxu0 0.0
      %744 = vmatpush1.msra.mxu0 %v203
      %745 = vmatprep.subr.mxu0 0.0
      %746 = vmatpush1.msra.mxu0 %v202
      %747 = vmatprep.subr.mxu0 0.0
      %748 = vmatpush1.msra.mxu0 %v201
      %749 = vmatprep.subr.mxu0 0.0
      %750 = vmatpush1.msra.mxu0 %v200
      %751 = vmatprep.subr.mxu0 0.0
      %752 = vmatpush1.msra.mxu0 %v199
      %753 = vmatprep.subr.mxu0 0.0
      %754 = vmatpush2.msra.mxu0 %v230
      %755 = vmatprep.subr.mxu0 0.0
      %756 = vmatpush2.msra.mxu0 %v229
      %757 = vmatprep.subr.mxu0 0.0
      %758 = vmatpush2.msra.mxu0 %v228
      %759 = vmatprep.subr.mxu0 0.0
      %760 = vmatpush2.msra.mxu0 %v227
      %761 = vmatprep.subr.mxu0 0.0
      %762 = vmatpush2.msra.mxu0 %v226
      %763 = vmatprep.subr.mxu0 0.0
      %764 = vmatpush2.msra.mxu0 %v225
      %765 = vmatprep.subr.mxu0 0.0
      %766 = vmatpush2.msra.mxu0 %v224
      %767 = vmatprep.subr.mxu0 0.0
      %768 = vmatpush2.msra.mxu0 %v223
      %769 = vmatprep.subr.mxu0 0.0
      %770 = vmatpush2.msra.mxu0 %v222
      %771 = vmatprep.subr.mxu0 0.0
      %772 = vmatpush2.msra.mxu0 %v221
      %773 = vmatprep.subr.mxu0 0.0
      %774 = vmatpush2.msra.mxu0 %v220
      %775 = vmatprep.subr.mxu0 0.0
      %776 = vmatpush2.msra.mxu0 %v219
      %777 = vmatprep.subr.mxu0 0.0
      %778 = vmatpush2.msra.mxu0 %v218
      %779 = vmatprep.subr.mxu0 0.0
      %780 = vmatpush2.msra.mxu0 %v217
      %781 = vmatprep.subr.mxu0 0.0
      %782 = vmatpush2.msra.mxu0 %v216
      %783 = vmatprep.subr.mxu0 0.0
      %784 = vmatpush2.msra.mxu0 %v215
      %785 = vmatprep.mubr.f32.mxu0 %v711
      %786 = vmatmul.mubr.f32.gmra.mxu0 %v194
      %v787 = vpop.f32.mrf.mxu0
      %v788 = vadd.f32 0.0, %v787
      %v789 = vpop.f32.mrf.mxu0
      %790 = vdwg.mxu0
      %791 = vmatprep.subr.mxu0 0.0
      %792 = vmatpush1.msra.mxu0 %v246
      %793 = vmatprep.subr.mxu0 0.0
      %794 = vmatpush1.msra.mxu0 %v245
      %795 = vmatprep.subr.mxu0 0.0
      %796 = vmatpush1.msra.mxu0 %v244
      %797 = vmatprep.subr.mxu0 0.0
      %798 = vmatpush1.msra.mxu0 %v243
      %799 = vmatprep.subr.mxu0 0.0
      %800 = vmatpush1.msra.mxu0 %v242
      %801 = vmatprep.subr.mxu0 0.0
      %802 = vmatpush1.msra.mxu0 %v241
      %803 = vmatprep.subr.mxu0 0.0
      %804 = vmatpush1.msra.mxu0 %v240
      %805 = vmatprep.subr.mxu0 0.0
      %806 = vmatpush1.msra.mxu0 %v239
      %807 = vmatprep.subr.mxu0 0.0
      %808 = vmatpush1.msra.mxu0 %v238
      %809 = vmatprep.subr.mxu0 0.0
      %810 = vmatpush1.msra.mxu0 %v237
      %811 = vmatprep.subr.mxu0 0.0
      %812 = vmatpush1.msra.mxu0 %v236
      %813 = vmatprep.subr.mxu0 0.0
      %814 = vmatpush1.msra.mxu0 %v235
      %815 = vmatprep.subr.mxu0 0.0
      %816 = vmatpush1.msra.mxu0 %v234
      %817 = vmatprep.subr.mxu0 0.0
      %818 = vmatpush1.msra.mxu0 %v233
      %819 = vmatprep.subr.mxu0 0.0
      %820 = vmatpush1.msra.mxu0 %v232
      %821 = vmatprep.subr.mxu0 0.0
      %822 = vmatpush1.msra.mxu0 %v231
      %823 = vmatprep.subr.mxu0 0.0
      %824 = vmatpush2.msra.mxu0 %v262
      %825 = vmatprep.subr.mxu0 0.0
      %826 = vmatpush2.msra.mxu0 %v261
      %827 = vmatprep.subr.mxu0 0.0
      %828 = vmatpush2.msra.mxu0 %v260
      %829 = vmatprep.subr.mxu0 0.0
      %830 = vmatpush2.msra.mxu0 %v259
      %831 = vmatprep.subr.mxu0 0.0
      %832 = vmatpush2.msra.mxu0 %v258
      %833 = vmatprep.subr.mxu0 0.0
      %834 = vmatpush2.msra.mxu0 %v257
      %835 = vmatprep.subr.mxu0 0.0
      %836 = vmatpush2.msra.mxu0 %v256
      %837 = vmatprep.subr.mxu0 0.0
      %838 = vmatpush2.msra.mxu0 %v255
      %839 = vmatprep.subr.mxu0 0.0
      %840 = vmatpush2.msra.mxu0 %v254
      %841 = vmatprep.subr.mxu0 0.0
      %842 = vmatpush2.msra.mxu0 %v253
      %843 = vmatprep.subr.mxu0 0.0
      %844 = vmatpush2.msra.mxu0 %v252
      %845 = vmatprep.subr.mxu0 0.0
      %846 = vmatpush2.msra.mxu0 %v251
      %847 = vmatprep.subr.mxu0 0.0
      %848 = vmatpush2.msra.mxu0 %v250
      %849 = vmatprep.subr.mxu0 0.0
      %850 = vmatpush2.msra.mxu0 %v249
      %851 = vmatprep.subr.mxu0 0.0
      %852 = vmatpush2.msra.mxu0 %v248
      %853 = vmatprep.subr.mxu0 0.0
      %854 = vmatpush2.msra.mxu0 %v247
      %855 = vmatprep.mubr.f32.mxu0 %v712
      %856 = vmatmul.mubr.f32.gmra.mxu0 %v195
      %v857 = vpop.f32.mrf.mxu0
      %v858 = vadd.f32 %v788, %v857
      %v859 = vpop.f32.mrf.mxu0
      %860 = vdwg.mxu0
      %861 = vmatprep.subr.mxu0 0.0
      %862 = vmatpush1.msra.mxu0 %v278
      %863 = vmatprep.subr.mxu0 0.0
      %864 = vmatpush1.msra.mxu0 %v277
      %865 = vmatprep.subr.mxu0 0.0
      %866 = vmatpush1.msra.mxu0 %v276
      %867 = vmatprep.subr.mxu0 0.0
      %868 = vmatpush1.msra.mxu0 %v275
      %869 = vmatprep.subr.mxu0 0.0
      %870 = vmatpush1.msra.mxu0 %v274
      %871 = vmatprep.subr.mxu0 0.0
      %872 = vmatpush1.msra.mxu0 %v273
      %873 = vmatprep.subr.mxu0 0.0
      %874 = vmatpush1.msra.mxu0 %v272
      %875 = vmatprep.subr.mxu0 0.0
      %876 = vmatpush1.msra.mxu0 %v271
      %877 = vmatprep.subr.mxu0 0.0
      %878 = vmatpush1.msra.mxu0 %v270
      %879 = vmatprep.subr.mxu0 0.0
      %880 = vmatpush1.msra.mxu0 %v269
      %881 = vmatprep.subr.mxu0 0.0
      %882 = vmatpush1.msra.mxu0 %v268
      %883 = vmatprep.subr.mxu0 0.0
      %884 = vmatpush1.msra.mxu0 %v267
      %885 = vmatprep.subr.mxu0 0.0
      %886 = vmatpush1.msra.mxu0 %v266
      %887 = vmatprep.subr.mxu0 0.0
      %888 = vmatpush1.msra.mxu0 %v265
      %889 = vmatprep.subr.mxu0 0.0
      %890 = vmatpush1.msra.mxu0 %v264
      %891 = vmatprep.subr.mxu0 0.0
      %892 = vmatpush1.msra.mxu0 %v263
      %893 = vmatprep.subr.mxu0 0.0
      %894 = vmatpush2.msra.mxu0 %v294
      %895 = vmatprep.subr.mxu0 0.0
      %896 = vmatpush2.msra.mxu0 %v293
      %897 = vmatprep.subr.mxu0 0.0
      %898 = vmatpush2.msra.mxu0 %v292
      %899 = vmatprep.subr.mxu0 0.0
      %900 = vmatpush2.msra.mxu0 %v291
      %901 = vmatprep.subr.mxu0 0.0
      %902 = vmatpush2.msra.mxu0 %v290
      %903 = vmatprep.subr.mxu0 0.0
      %904 = vmatpush2.msra.mxu0 %v289
      %905 = vmatprep.subr.mxu0 0.0
      %906 = vmatpush2.msra.mxu0 %v288
      %907 = vmatprep.subr.mxu0 0.0
      %908 = vmatpush2.msra.mxu0 %v287
      %909 = vmatprep.subr.mxu0 0.0
      %910 = vmatpush2.msra.mxu0 %v286
      %911 = vmatprep.subr.mxu0 0.0
      %912 = vmatpush2.msra.mxu0 %v285
      %913 = vmatprep.subr.mxu0 0.0
      %914 = vmatpush2.msra.mxu0 %v284
      %915 = vmatprep.subr.mxu0 0.0
      %916 = vmatpush2.msra.mxu0 %v283
      %917 = vmatprep.subr.mxu0 0.0
      %918 = vmatpush2.msra.mxu0 %v282
      %919 = vmatprep.subr.mxu0 0.0
      %920 = vmatpush2.msra.mxu0 %v281
      %921 = vmatprep.subr.mxu0 0.0
      %922 = vmatpush2.msra.mxu0 %v280
      %923 = vmatprep.subr.mxu0 0.0
      %924 = vmatpush2.msra.mxu0 %v279
      %925 = vmatprep.mubr.f32.mxu0 %v713
      %926 = vmatmul.mubr.f32.gmra.mxu0 %v196
      %v927 = vpop.f32.mrf.mxu0
      %v928 = vadd.f32 %v858, %v927
      %v929 = vpop.f32.mrf.mxu0
      %930 = vdwg.mxu0
      %931 = vmatprep.subr.mxu0 0.0
      %932 = vmatpush1.msra.mxu0 %v310
      %933 = vmatprep.subr.mxu0 0.0
      %934 = vmatpush1.msra.mxu0 %v309
      %935 = vmatprep.subr.mxu0 0.0
      %936 = vmatpush1.msra.mxu0 %v308
      %937 = vmatprep.subr.mxu0 0.0
      %938 = vmatpush1.msra.mxu0 %v307
      %939 = vmatprep.subr.mxu0 0.0
      %940 = vmatpush1.msra.mxu0 %v306
      %941 = vmatprep.subr.mxu0 0.0
      %942 = vmatpush1.msra.mxu0 %v305
      %943 = vmatprep.subr.mxu0 0.0
      %944 = vmatpush1.msra.mxu0 %v304
      %945 = vmatprep.subr.mxu0 0.0
      %946 = vmatpush1.msra.mxu0 %v303
      %947 = vmatprep.subr.mxu0 0.0
      %948 = vmatpush1.msra.mxu0 %v302
      %949 = vmatprep.subr.mxu0 0.0
      %950 = vmatpush1.msra.mxu0 %v301
      %951 = vmatprep.subr.mxu0 0.0
      %952 = vmatpush1.msra.mxu0 %v300
      %953 = vmatprep.subr.mxu0 0.0
      %954 = vmatpush1.msra.mxu0 %v299
      %955 = vmatprep.subr.mxu0 0.0
      %956 = vmatpush1.msra.mxu0 %v298
      %957 = vmatprep.subr.mxu0 0.0
      %958 = vmatpush1.msra.mxu0 %v297
      %959 = vmatprep.subr.mxu0 0.0
      %960 = vmatpush1.msra.mxu0 %v296
      %961 = vmatprep.subr.mxu0 0.0
      %962 = vmatpush1.msra.mxu0 %v295
      %963 = vmatprep.subr.mxu0 0.0
      %964 = vmatpush2.msra.mxu0 %v326
      %965 = vmatprep.subr.mxu0 0.0
      %966 = vmatpush2.msra.mxu0 %v325
      %967 = vmatprep.subr.mxu0 0.0
      %968 = vmatpush2.msra.mxu0 %v324
      %969 = vmatprep.subr.mxu0 0.0
      %970 = vmatpush2.msra.mxu0 %v323
      %971 = vmatprep.subr.mxu0 0.0
      %972 = vmatpush2.msra.mxu0 %v322
      %973 = vmatprep.subr.mxu0 0.0
      %974 = vmatpush2.msra.mxu0 %v321
      %975 = vmatprep.subr.mxu0 0.0
      %976 = vmatpush2.msra.mxu0 %v320
      %977 = vmatprep.subr.mxu0 0.0
      %978 = vmatpush2.msra.mxu0 %v319
      %979 = vmatprep.subr.mxu0 0.0
      %980 = vmatpush2.msra.mxu0 %v318
      %981 = vmatprep.subr.mxu0 0.0
      %982 = vmatpush2.msra.mxu0 %v317
      %983 = vmatprep.subr.mxu0 0.0
      %984 = vmatpush2.msra.mxu0 %v316
      %985 = vmatprep.subr.mxu0 0.0
      %986 = vmatpush2.msra.mxu0 %v315
      %987 = vmatprep.subr.mxu0 0.0
      %988 = vmatpush2.msra.mxu0 %v314
      %989 = vmatprep.subr.mxu0 0.0
      %990 = vmatpush2.msra.mxu0 %v313
      %991 = vmatprep.subr.mxu0 0.0
      %992 = vmatpush2.msra.mxu0 %v312
      %993 = vmatprep.subr.mxu0 0.0
      %994 = vmatpush2.msra.mxu0 %v311
      %995 = vmatprep.mubr.f32.mxu0 %v714
      %996 = vmatmul.mubr.f32.gmra.mxu0 %v197
      %v997 = vpop.f32.mrf.mxu0
      %v998 = vadd.f32 %v928, %v997
      %v999 = vpop.f32.mrf.mxu0
      %1000 = vdwg.mxu0
      %1001 = vmatprep.subr.mxu0 0.0
      %1002 = vmatpush1.msra.mxu0 0.0
      %1003 = vmatprep.subr.mxu0 0.0
      %1004 = vmatpush1.msra.mxu0 0.0
      %1005 = vmatprep.subr.mxu0 0.0
      %1006 = vmatpush1.msra.mxu0 0.0
      %1007 = vmatprep.subr.mxu0 0.0
      %1008 = vmatpush1.msra.mxu0 0.0
      %1009 = vmatprep.subr.mxu0 0.0
      %1010 = vmatpush1.msra.mxu0 0.0
      %1011 = vmatprep.subr.mxu0 0.0
      %1012 = vmatpush1.msra.mxu0 0.0
      %1013 = vmatprep.subr.mxu0 0.0
      %1014 = vmatpush1.msra.mxu0 0.0
      %1015 = vmatprep.subr.mxu0 0.0
      %1016 = vmatpush1.msra.mxu0 %v354
      %1017 = vmatprep.subr.mxu0 0.0
      %1018 = vmatpush1.msra.mxu0 %v334
      %1019 = vmatprep.subr.mxu0 0.0
      %1020 = vmatpush1.msra.mxu0 %v333
      %1021 = vmatprep.subr.mxu0 0.0
      %1022 = vmatpush1.msra.mxu0 %v332
      %1023 = vmatprep.subr.mxu0 0.0
      %1024 = vmatpush1.msra.mxu0 %v331
      %1025 = vmatprep.subr.mxu0 0.0
      %1026 = vmatpush1.msra.mxu0 %v330
      %1027 = vmatprep.subr.mxu0 0.0
      %1028 = vmatpush1.msra.mxu0 %v329
      %1029 = vmatprep.subr.mxu0 0.0
      %1030 = vmatpush1.msra.mxu0 %v328
      %1031 = vmatprep.subr.mxu0 0.0
      %1032 = vmatpush1.msra.mxu0 %v327
      %1033 = vmatprep.subr.mxu0 0.0
      %1034 = vmatpush2.msra.mxu0 0.0
      %1035 = vmatprep.subr.mxu0 0.0
      %1036 = vmatpush2.msra.mxu0 0.0
      %1037 = vmatprep.subr.mxu0 0.0
      %1038 = vmatpush2.msra.mxu0 0.0
      %1039 = vmatprep.subr.mxu0 0.0
      %1040 = vmatpush2.msra.mxu0 0.0
      %1041 = vmatprep.subr.mxu0 0.0
      %1042 = vmatpush2.msra.mxu0 0.0
      %1043 = vmatprep.subr.mxu0 0.0
      %1044 = vmatpush2.msra.mxu0 0.0
      %1045 = vmatprep.subr.mxu0 0.0
      %1046 = vmatpush2.msra.mxu0 0.0
      %1047 = vmatprep.subr.mxu0 0.0
      %1048 = vmatpush2.msra.mxu0 0.0
      %1049 = vmatprep.subr.mxu0 0.0
      %1050 = vmatpush2.msra.mxu0 0.0
      %1051 = vmatprep.subr.mxu0 0.0
      %1052 = vmatpush2.msra.mxu0 0.0
      %1053 = vmatprep.subr.mxu0 0.0
      %1054 = vmatpush2.msra.mxu0 0.0
      %1055 = vmatprep.subr.mxu0 0.0
      %1056 = vmatpush2.msra.mxu0 0.0
      %1057 = vmatprep.subr.mxu0 0.0
      %1058 = vmatpush2.msra.mxu0 0.0
      %1059 = vmatprep.subr.mxu0 0.0
      %1060 = vmatpush2.msra.mxu0 0.0
      %1061 = vmatprep.subr.mxu0 0.0
      %1062 = vmatpush2.msra.mxu0 0.0
      %1063 = vmatprep.subr.mxu0 0.0
      %1064 = vmatpush2.msra.mxu0 0.0
      %1065 = vmatprep.mubr.f32.mxu0 0.0
      %1066 = vmatmul.mubr.f32.gmra.mxu0 %v719
      %v1067 = vpop.f32.mrf.mxu0
      %v1068 = vadd.f32 %v998, %v1067
      %v1069 = vpop.f32.mrf.mxu0
      %1070 = vdwg.mxu0
      %v1071 = vmul.f32 %v189, %v189
      %v1072 = vmul.f32 %v190, %v190
      %v1073 = vmul.f32 %v191, %v191
      %v1074 = vmul.f32 %v192, %v192
      %v1075 = vmul.f32 %v193, %v193
      %v1081 = vcombine.high %v1071, %v1071
      %v1082 = vcombine.high %v1072, %v1072
      %v1083 = vcombine.high %v1073, %v1073
      %v1084 = vcombine.high %v1074, %v1074
      %v1089 = vsel %vm349, %v1075, 0
      %1091 = vmatprep.subr.mxu0 0.0
      %1092 = vmatpush1.msra.mxu0 %v214
      %1093 = vmatprep.subr.mxu0 0.0
      %1094 = vmatpush1.msra.mxu0 %v213
      %1095 = vmatprep.subr.mxu0 0.0
      %1096 = vmatpush1.msra.mxu0 %v212
      %1097 = vmatprep.subr.mxu0 0.0
      %1098 = vmatpush1.msra.mxu0 %v211
      %1099 = vmatprep.subr.mxu0 0.0
      %1100 = vmatpush1.msra.mxu0 %v210
      %1101 = vmatprep.subr.mxu0 0.0
      %1102 = vmatpush1.msra.mxu0 %v209
      %1103 = vmatprep.subr.mxu0 0.0
      %1104 = vmatpush1.msra.mxu0 %v208
      %1105 = vmatprep.subr.mxu0 0.0
      %1106 = vmatpush1.msra.mxu0 %v207
      %1107 = vmatprep.subr.mxu0 0.0
      %1108 = vmatpush1.msra.mxu0 %v206
      %1109 = vmatprep.subr.mxu0 0.0
      %1110 = vmatpush1.msra.mxu0 %v205
      %1111 = vmatprep.subr.mxu0 0.0
      %1112 = vmatpush1.msra.mxu0 %v204
      %1113 = vmatprep.subr.mxu0 0.0
      %1114 = vmatpush1.msra.mxu0 %v203
      %1115 = vmatprep.subr.mxu0 0.0
      %1116 = vmatpush1.msra.mxu0 %v202
      %1117 = vmatprep.subr.mxu0 0.0
      %1118 = vmatpush1.msra.mxu0 %v201
      %1119 = vmatprep.subr.mxu0 0.0
      %1120 = vmatpush1.msra.mxu0 %v200
      %1121 = vmatprep.subr.mxu0 0.0
      %1122 = vmatpush1.msra.mxu0 %v199
      %1123 = vmatprep.subr.mxu0 0.0
      %1124 = vmatpush2.msra.mxu0 %v230
      %1125 = vmatprep.subr.mxu0 0.0
      %1126 = vmatpush2.msra.mxu0 %v229
      %1127 = vmatprep.subr.mxu0 0.0
      %1128 = vmatpush2.msra.mxu0 %v228
      %1129 = vmatprep.subr.mxu0 0.0
      %1130 = vmatpush2.msra.mxu0 %v227
      %1131 = vmatprep.subr.mxu0 0.0
      %1132 = vmatpush2.msra.mxu0 %v226
      %1133 = vmatprep.subr.mxu0 0.0
      %1134 = vmatpush2.msra.mxu0 %v225
      %1135 = vmatprep.subr.mxu0 0.0
      %1136 = vmatpush2.msra.mxu0 %v224
      %1137 = vmatprep.subr.mxu0 0.0
      %1138 = vmatpush2.msra.mxu0 %v223
      %1139 = vmatprep.subr.mxu0 0.0
      %1140 = vmatpush2.msra.mxu0 %v222
      %1141 = vmatprep.subr.mxu0 0.0
      %1142 = vmatpush2.msra.mxu0 %v221
      %1143 = vmatprep.subr.mxu0 0.0
      %1144 = vmatpush2.msra.mxu0 %v220
      %1145 = vmatprep.subr.mxu0 0.0
      %1146 = vmatpush2.msra.mxu0 %v219
      %1147 = vmatprep.subr.mxu0 0.0
      %1148 = vmatpush2.msra.mxu0 %v218
      %1149 = vmatprep.subr.mxu0 0.0
      %1150 = vmatpush2.msra.mxu0 %v217
      %1151 = vmatprep.subr.mxu0 0.0
      %1152 = vmatpush2.msra.mxu0 %v216
      %1153 = vmatprep.subr.mxu0 0.0
      %1154 = vmatpush2.msra.mxu0 %v215
      %1155 = vmatprep.mubr.f32.mxu0 %v1081
      %1156 = vmatmul.mubr.f32.gmra.mxu0 %v1071
      %v1157 = vpop.f32.mrf.mxu0
      %v1158 = vadd.f32 0.0, %v1157
      %v1159 = vpop.f32.mrf.mxu0
      %1160 = vdwg.mxu0
      %1161 = vmatprep.subr.mxu0 0.0
      %1162 = vmatpush1.msra.mxu0 %v246
      %1163 = vmatprep.subr.mxu0 0.0
      %1164 = vmatpush1.msra.mxu0 %v245
      %1165 = vmatprep.subr.mxu0 0.0
      %1166 = vmatpush1.msra.mxu0 %v244
      %1167 = vmatprep.subr.mxu0 0.0
      %1168 = vmatpush1.msra.mxu0 %v243
      %1169 = vmatprep.subr.mxu0 0.0
      %1170 = vmatpush1.msra.mxu0 %v242
      %1171 = vmatprep.subr.mxu0 0.0
      %1172 = vmatpush1.msra.mxu0 %v241
      %1173 = vmatprep.subr.mxu0 0.0
      %1174 = vmatpush1.msra.mxu0 %v240
      %1175 = vmatprep.subr.mxu0 0.0
      %1176 = vmatpush1.msra.mxu0 %v239
      %1177 = vmatprep.subr.mxu0 0.0
      %1178 = vmatpush1.msra.mxu0 %v238
      %1179 = vmatprep.subr.mxu0 0.0
      %1180 = vmatpush1.msra.mxu0 %v237
      %1181 = vmatprep.subr.mxu0 0.0
      %1182 = vmatpush1.msra.mxu0 %v236
      %1183 = vmatprep.subr.mxu0 0.0
      %1184 = vmatpush1.msra.mxu0 %v235
      %1185 = vmatprep.subr.mxu0 0.0
      %1186 = vmatpush1.msra.mxu0 %v234
      %1187 = vmatprep.subr.mxu0 0.0
      %1188 = vmatpush1.msra.mxu0 %v233
      %1189 = vmatprep.subr.mxu0 0.0
      %1190 = vmatpush1.msra.mxu0 %v232
      %1191 = vmatprep.subr.mxu0 0.0
      %1192 = vmatpush1.msra.mxu0 %v231
      %1193 = vmatprep.subr.mxu0 0.0
      %1194 = vmatpush2.msra.mxu0 %v262
      %1195 = vmatprep.subr.mxu0 0.0
      %1196 = vmatpush2.msra.mxu0 %v261
      %1197 = vmatprep.subr.mxu0 0.0
      %1198 = vmatpush2.msra.mxu0 %v260
      %1199 = vmatprep.subr.mxu0 0.0
      %1200 = vmatpush2.msra.mxu0 %v259
      %1201 = vmatprep.subr.mxu0 0.0
      %1202 = vmatpush2.msra.mxu0 %v258
      %1203 = vmatprep.subr.mxu0 0.0
      %1204 = vmatpush2.msra.mxu0 %v257
      %1205 = vmatprep.subr.mxu0 0.0
      %1206 = vmatpush2.msra.mxu0 %v256
      %1207 = vmatprep.subr.mxu0 0.0
      %1208 = vmatpush2.msra.mxu0 %v255
      %1209 = vmatprep.subr.mxu0 0.0
      %1210 = vmatpush2.msra.mxu0 %v254
      %1211 = vmatprep.subr.mxu0 0.0
      %1212 = vmatpush2.msra.mxu0 %v253
      %1213 = vmatprep.subr.mxu0 0.0
      %1214 = vmatpush2.msra.mxu0 %v252
      %1215 = vmatprep.subr.mxu0 0.0
      %1216 = vmatpush2.msra.mxu0 %v251
      %1217 = vmatprep.subr.mxu0 0.0
      %1218 = vmatpush2.msra.mxu0 %v250
      %1219 = vmatprep.subr.mxu0 0.0
      %1220 = vmatpush2.msra.mxu0 %v249
      %1221 = vmatprep.subr.mxu0 0.0
      %1222 = vmatpush2.msra.mxu0 %v248
      %1223 = vmatprep.subr.mxu0 0.0
      %1224 = vmatpush2.msra.mxu0 %v247
      %1225 = vmatprep.mubr.f32.mxu0 %v1082
      %1226 = vmatmul.mubr.f32.gmra.mxu0 %v1072
      %v1227 = vpop.f32.mrf.mxu0
      %v1228 = vadd.f32 %v1158, %v1227
      %v1229 = vpop.f32.mrf.mxu0
      %1230 = vdwg.mxu0
      %1231 = vmatprep.subr.mxu0 0.0
      %1232 = vmatpush1.msra.mxu0 %v278
      %1233 = vmatprep.subr.mxu0 0.0
      %1234 = vmatpush1.msra.mxu0 %v277
      %1235 = vmatprep.subr.mxu0 0.0
      %1236 = vmatpush1.msra.mxu0 %v276
      %1237 = vmatprep.subr.mxu0 0.0
      %1238 = vmatpush1.msra.mxu0 %v275
      %1239 = vmatprep.subr.mxu0 0.0
      %1240 = vmatpush1.msra.mxu0 %v274
      %1241 = vmatprep.subr.mxu0 0.0
      %1242 = vmatpush1.msra.mxu0 %v273
      %1243 = vmatprep.subr.mxu0 0.0
      %1244 = vmatpush1.msra.mxu0 %v272
      %1245 = vmatprep.subr.mxu0 0.0
      %1246 = vmatpush1.msra.mxu0 %v271
      %1247 = vmatprep.subr.mxu0 0.0
      %1248 = vmatpush1.msra.mxu0 %v270
      %1249 = vmatprep.subr.mxu0 0.0
      %1250 = vmatpush1.msra.mxu0 %v269
      %1251 = vmatprep.subr.mxu0 0.0
      %1252 = vmatpush1.msra.mxu0 %v268
      %1253 = vmatprep.subr.mxu0 0.0
      %1254 = vmatpush1.msra.mxu0 %v267
      %1255 = vmatprep.subr.mxu0 0.0
      %1256 = vmatpush1.msra.mxu0 %v266
      %1257 = vmatprep.subr.mxu0 0.0
      %1258 = vmatpush1.msra.mxu0 %v265
      %1259 = vmatprep.subr.mxu0 0.0
      %1260 = vmatpush1.msra.mxu0 %v264
      %1261 = vmatprep.subr.mxu0 0.0
      %1262 = vmatpush1.msra.mxu0 %v263
      %1263 = vmatprep.subr.mxu0 0.0
      %1264 = vmatpush2.msra.mxu0 %v294
      %1265 = vmatprep.subr.mxu0 0.0
      %1266 = vmatpush2.msra.mxu0 %v293
      %1267 = vmatprep.subr.mxu0 0.0
      %1268 = vmatpush2.msra.mxu0 %v292
      %1269 = vmatprep.subr.mxu0 0.0
      %1270 = vmatpush2.msra.mxu0 %v291
      %1271 = vmatprep.subr.mxu0 0.0
      %1272 = vmatpush2.msra.mxu0 %v290
      %1273 = vmatprep.subr.mxu0 0.0
      %1274 = vmatpush2.msra.mxu0 %v289
      %1275 = vmatprep.subr.mxu0 0.0
      %1276 = vmatpush2.msra.mxu0 %v288
      %1277 = vmatprep.subr.mxu0 0.0
      %1278 = vmatpush2.msra.mxu0 %v287
      %1279 = vmatprep.subr.mxu0 0.0
      %1280 = vmatpush2.msra.mxu0 %v286
      %1281 = vmatprep.subr.mxu0 0.0
      %1282 = vmatpush2.msra.mxu0 %v285
      %1283 = vmatprep.subr.mxu0 0.0
      %1284 = vmatpush2.msra.mxu0 %v284
      %1285 = vmatprep.subr.mxu0 0.0
      %1286 = vmatpush2.msra.mxu0 %v283
      %1287 = vmatprep.subr.mxu0 0.0
      %1288 = vmatpush2.msra.mxu0 %v282
      %1289 = vmatprep.subr.mxu0 0.0
      %1290 = vmatpush2.msra.mxu0 %v281
      %1291 = vmatprep.subr.mxu0 0.0
      %1292 = vmatpush2.msra.mxu0 %v280
      %1293 = vmatprep.subr.mxu0 0.0
      %1294 = vmatpush2.msra.mxu0 %v279
      %1295 = vmatprep.mubr.f32.mxu0 %v1083
      %1296 = vmatmul.mubr.f32.gmra.mxu0 %v1073
      %v1297 = vpop.f32.mrf.mxu0
      %v1298 = vadd.f32 %v1228, %v1297
      %v1299 = vpop.f32.mrf.mxu0
      %1300 = vdwg.mxu0
      %1301 = vmatprep.subr.mxu0 0.0
      %1302 = vmatpush1.msra.mxu0 %v310
      %1303 = vmatprep.subr.mxu0 0.0
      %1304 = vmatpush1.msra.mxu0 %v309
      %1305 = vmatprep.subr.mxu0 0.0
      %1306 = vmatpush1.msra.mxu0 %v308
      %1307 = vmatprep.subr.mxu0 0.0
      %1308 = vmatpush1.msra.mxu0 %v307
      %1309 = vmatprep.subr.mxu0 0.0
      %1310 = vmatpush1.msra.mxu0 %v306
      %1311 = vmatprep.subr.mxu0 0.0
      %1312 = vmatpush1.msra.mxu0 %v305
      %1313 = vmatprep.subr.mxu0 0.0
      %1314 = vmatpush1.msra.mxu0 %v304
      %1315 = vmatprep.subr.mxu0 0.0
      %1316 = vmatpush1.msra.mxu0 %v303
      %1317 = vmatprep.subr.mxu0 0.0
      %1318 = vmatpush1.msra.mxu0 %v302
      %1319 = vmatprep.subr.mxu0 0.0
      %1320 = vmatpush1.msra.mxu0 %v301
      %1321 = vmatprep.subr.mxu0 0.0
      %1322 = vmatpush1.msra.mxu0 %v300
      %1323 = vmatprep.subr.mxu0 0.0
      %1324 = vmatpush1.msra.mxu0 %v299
      %1325 = vmatprep.subr.mxu0 0.0
      %1326 = vmatpush1.msra.mxu0 %v298
      %1327 = vmatprep.subr.mxu0 0.0
      %1328 = vmatpush1.msra.mxu0 %v297
      %1329 = vmatprep.subr.mxu0 0.0
      %1330 = vmatpush1.msra.mxu0 %v296
      %1331 = vmatprep.subr.mxu0 0.0
      %1332 = vmatpush1.msra.mxu0 %v295
      %1333 = vmatprep.subr.mxu0 0.0
      %1334 = vmatpush2.msra.mxu0 %v326
      %1335 = vmatprep.subr.mxu0 0.0
      %1336 = vmatpush2.msra.mxu0 %v325
      %1337 = vmatprep.subr.mxu0 0.0
      %1338 = vmatpush2.msra.mxu0 %v324
      %1339 = vmatprep.subr.mxu0 0.0
      %1340 = vmatpush2.msra.mxu0 %v323
      %1341 = vmatprep.subr.mxu0 0.0
      %1342 = vmatpush2.msra.mxu0 %v322
      %1343 = vmatprep.subr.mxu0 0.0
      %1344 = vmatpush2.msra.mxu0 %v321
      %1345 = vmatprep.subr.mxu0 0.0
      %1346 = vmatpush2.msra.mxu0 %v320
      %1347 = vmatprep.subr.mxu0 0.0
      %1348 = vmatpush2.msra.mxu0 %v319
      %1349 = vmatprep.subr.mxu0 0.0
      %1350 = vmatpush2.msra.mxu0 %v318
      %1351 = vmatprep.subr.mxu0 0.0
      %1352 = vmatpush2.msra.mxu0 %v317
      %1353 = vmatprep.subr.mxu0 0.0
      %1354 = vmatpush2.msra.mxu0 %v316
      %1355 = vmatprep.subr.mxu0 0.0
      %1356 = vmatpush2.msra.mxu0 %v315
      %1357 = vmatprep.subr.mxu0 0.0
      %1358 = vmatpush2.msra.mxu0 %v314
      %1359 = vmatprep.subr.mxu0 0.0
      %1360 = vmatpush2.msra.mxu0 %v313
      %1361 = vmatprep.subr.mxu0 0.0
      %1362 = vmatpush2.msra.mxu0 %v312
      %1363 = vmatprep.subr.mxu0 0.0
      %1364 = vmatpush2.msra.mxu0 %v311
      %1365 = vmatprep.mubr.f32.mxu0 %v1084
      %1366 = vmatmul.mubr.f32.gmra.mxu0 %v1074
      %v1367 = vpop.f32.mrf.mxu0
      %v1368 = vadd.f32 %v1298, %v1367
      %v1369 = vpop.f32.mrf.mxu0
      %1370 = vdwg.mxu0
      %1371 = vmatprep.subr.mxu0 0.0
      %1372 = vmatpush1.msra.mxu0 0.0
      %1373 = vmatprep.subr.mxu0 0.0
      %1374 = vmatpush1.msra.mxu0 0.0
      %1375 = vmatprep.subr.mxu0 0.0
      %1376 = vmatpush1.msra.mxu0 0.0
      %1377 = vmatprep.subr.mxu0 0.0
      %1378 = vmatpush1.msra.mxu0 0.0
      %1379 = vmatprep.subr.mxu0 0.0
      %1380 = vmatpush1.msra.mxu0 0.0
      %1381 = vmatprep.subr.mxu0 0.0
      %1382 = vmatpush1.msra.mxu0 0.0
      %1383 = vmatprep.subr.mxu0 0.0
      %1384 = vmatpush1.msra.mxu0 0.0
      %1385 = vmatprep.subr.mxu0 0.0
      %1386 = vmatpush1.msra.mxu0 %v354
      %1387 = vmatprep.subr.mxu0 0.0
      %1388 = vmatpush1.msra.mxu0 %v334
      %1389 = vmatprep.subr.mxu0 0.0
      %1390 = vmatpush1.msra.mxu0 %v333
      %1391 = vmatprep.subr.mxu0 0.0
      %1392 = vmatpush1.msra.mxu0 %v332
      %1393 = vmatprep.subr.mxu0 0.0
      %1394 = vmatpush1.msra.mxu0 %v331
      %1395 = vmatprep.subr.mxu0 0.0
      %1396 = vmatpush1.msra.mxu0 %v330
      %1397 = vmatprep.subr.mxu0 0.0
      %1398 = vmatpush1.msra.mxu0 %v329
      %1399 = vmatprep.subr.mxu0 0.0
      %1400 = vmatpush1.msra.mxu0 %v328
      %1401 = vmatprep.subr.mxu0 0.0
      %1402 = vmatpush1.msra.mxu0 %v327
      %1403 = vmatprep.subr.mxu0 0.0
      %1404 = vmatpush2.msra.mxu0 0.0
      %1405 = vmatprep.subr.mxu0 0.0
      %1406 = vmatpush2.msra.mxu0 0.0
      %1407 = vmatprep.subr.mxu0 0.0
      %1408 = vmatpush2.msra.mxu0 0.0
      %1409 = vmatprep.subr.mxu0 0.0
      %1410 = vmatpush2.msra.mxu0 0.0
      %1411 = vmatprep.subr.mxu0 0.0
      %1412 = vmatpush2.msra.mxu0 0.0
      %1413 = vmatprep.subr.mxu0 0.0
      %1414 = vmatpush2.msra.mxu0 0.0
      %1415 = vmatprep.subr.mxu0 0.0
      %1416 = vmatpush2.msra.mxu0 0.0
      %1417 = vmatprep.subr.mxu0 0.0
      %1418 = vmatpush2.msra.mxu0 0.0
      %1419 = vmatprep.subr.mxu0 0.0
      %1420 = vmatpush2.msra.mxu0 0.0
      %1421 = vmatprep.subr.mxu0 0.0
      %1422 = vmatpush2.msra.mxu0 0.0
      %1423 = vmatprep.subr.mxu0 0.0
      %1424 = vmatpush2.msra.mxu0 0.0
      %1425 = vmatprep.subr.mxu0 0.0
      %1426 = vmatpush2.msra.mxu0 0.0
      %1427 = vmatprep.subr.mxu0 0.0
      %1428 = vmatpush2.msra.mxu0 0.0
      %1429 = vmatprep.subr.mxu0 0.0
      %1430 = vmatpush2.msra.mxu0 0.0
      %1431 = vmatprep.subr.mxu0 0.0
      %1432 = vmatpush2.msra.mxu0 0.0
      %1433 = vmatprep.subr.mxu0 0.0
      %1434 = vmatpush2.msra.mxu0 0.0
      %1435 = vmatprep.mubr.f32.mxu0 0.0
      %1436 = vmatmul.mubr.f32.gmra.mxu0 %v1089
      %v1437 = vpop.f32.mrf.mxu0
      %v1438 = vadd.f32 %v1368, %v1437
      %v1439 = vpop.f32.mrf.mxu0
      %1440 = vdwg.mxu0
      %v1441 = vmul.f32 %v194, %v194
      %v1442 = vmul.f32 %v195, %v195
      %v1443 = vmul.f32 %v196, %v196
      %v1444 = vmul.f32 %v197, %v197
      %v1445 = vmul.f32 %v198, %v198
      %v1451 = vcombine.high %v1441, %v1441
      %v1452 = vcombine.high %v1442, %v1442
      %v1453 = vcombine.high %v1443, %v1443
      %v1454 = vcombine.high %v1444, %v1444
      %v1459 = vsel %vm349, %v1445, 0
      %1461 = vmatprep.subr.mxu0 0.0
      %1462 = vmatpush1.msra.mxu0 %v214
      %1463 = vmatprep.subr.mxu0 0.0
      %1464 = vmatpush1.msra.mxu0 %v213
      %1465 = vmatprep.subr.mxu0 0.0
      %1466 = vmatpush1.msra.mxu0 %v212
      %1467 = vmatprep.subr.mxu0 0.0
      %1468 = vmatpush1.msra.mxu0 %v211
      %1469 = vmatprep.subr.mxu0 0.0
      %1470 = vmatpush1.msra.mxu0 %v210
      %1471 = vmatprep.subr.mxu0 0.0
      %1472 = vmatpush1.msra.mxu0 %v209
      %1473 = vmatprep.subr.mxu0 0.0
      %1474 = vmatpush1.msra.mxu0 %v208
      %1475 = vmatprep.subr.mxu0 0.0
      %1476 = vmatpush1.msra.mxu0 %v207
      %1477 = vmatprep.subr.mxu0 0.0
      %1478 = vmatpush1.msra.mxu0 %v206
      %1479 = vmatprep.subr.mxu0 0.0
      %1480 = vmatpush1.msra.mxu0 %v205
      %1481 = vmatprep.subr.mxu0 0.0
      %1482 = vmatpush1.msra.mxu0 %v204
      %1483 = vmatprep.subr.mxu0 0.0
      %1484 = vmatpush1.msra.mxu0 %v203
      %1485 = vmatprep.subr.mxu0 0.0
      %1486 = vmatpush1.msra.mxu0 %v202
      %1487 = vmatprep.subr.mxu0 0.0
      %1488 = vmatpush1.msra.mxu0 %v201
      %1489 = vmatprep.subr.mxu0 0.0
      %1490 = vmatpush1.msra.mxu0 %v200
      %1491 = vmatprep.subr.mxu0 0.0
      %1492 = vmatpush1.msra.mxu0 %v199
      %1493 = vmatprep.subr.mxu0 0.0
      %1494 = vmatpush2.msra.mxu0 %v230
      %1495 = vmatprep.subr.mxu0 0.0
      %1496 = vmatpush2.msra.mxu0 %v229
      %1497 = vmatprep.subr.mxu0 0.0
      %1498 = vmatpush2.msra.mxu0 %v228
      %1499 = vmatprep.subr.mxu0 0.0
      %1500 = vmatpush2.msra.mxu0 %v227
      %1501 = vmatprep.subr.mxu0 0.0
      %1502 = vmatpush2.msra.mxu0 %v226
      %1503 = vmatprep.subr.mxu0 0.0
      %1504 = vmatpush2.msra.mxu0 %v225
      %1505 = vmatprep.subr.mxu0 0.0
      %1506 = vmatpush2.msra.mxu0 %v224
      %1507 = vmatprep.subr.mxu0 0.0
      %1508 = vmatpush2.msra.mxu0 %v223
      %1509 = vmatprep.subr.mxu0 0.0
      %1510 = vmatpush2.msra.mxu0 %v222
      %1511 = vmatprep.subr.mxu0 0.0
      %1512 = vmatpush2.msra.mxu0 %v221
      %1513 = vmatprep.subr.mxu0 0.0
      %1514 = vmatpush2.msra.mxu0 %v220
      %1515 = vmatprep.subr.mxu0 0.0
      %1516 = vmatpush2.msra.mxu0 %v219
      %1517 = vmatprep.subr.mxu0 0.0
      %1518 = vmatpush2.msra.mxu0 %v218
      %1519 = vmatprep.subr.mxu0 0.0
      %1520 = vmatpush2.msra.mxu0 %v217
      %1521 = vmatprep.subr.mxu0 0.0
      %1522 = vmatpush2.msra.mxu0 %v216
      %1523 = vmatprep.subr.mxu0 0.0
      %1524 = vmatpush2.msra.mxu0 %v215
      %1525 = vmatprep.mubr.f32.mxu0 %v1451
      %1526 = vmatmul.mubr.f32.gmra.mxu0 %v1441
      %v1527 = vpop.f32.mrf.mxu0
      %v1528 = vadd.f32 0.0, %v1527
      %v1529 = vpop.f32.mrf.mxu0
      %1530 = vdwg.mxu0
      %1531 = vmatprep.subr.mxu0 0.0
      %1532 = vmatpush1.msra.mxu0 %v246
      %1533 = vmatprep.subr.mxu0 0.0
      %1534 = vmatpush1.msra.mxu0 %v245
      %1535 = vmatprep.subr.mxu0 0.0
      %1536 = vmatpush1.msra.mxu0 %v244
      %1537 = vmatprep.subr.mxu0 0.0
      %1538 = vmatpush1.msra.mxu0 %v243
      %1539 = vmatprep.subr.mxu0 0.0
      %1540 = vmatpush1.msra.mxu0 %v242
      %1541 = vmatprep.subr.mxu0 0.0
      %1542 = vmatpush1.msra.mxu0 %v241
      %1543 = vmatprep.subr.mxu0 0.0
      %1544 = vmatpush1.msra.mxu0 %v240
      %1545 = vmatprep.subr.mxu0 0.0
      %1546 = vmatpush1.msra.mxu0 %v239
      %1547 = vmatprep.subr.mxu0 0.0
      %1548 = vmatpush1.msra.mxu0 %v238
      %1549 = vmatprep.subr.mxu0 0.0
      %1550 = vmatpush1.msra.mxu0 %v237
      %1551 = vmatprep.subr.mxu0 0.0
      %1552 = vmatpush1.msra.mxu0 %v236
      %1553 = vmatprep.subr.mxu0 0.0
      %1554 = vmatpush1.msra.mxu0 %v235
      %1555 = vmatprep.subr.mxu0 0.0
      %1556 = vmatpush1.msra.mxu0 %v234
      %1557 = vmatprep.subr.mxu0 0.0
      %1558 = vmatpush1.msra.mxu0 %v233
      %1559 = vmatprep.subr.mxu0 0.0
      %1560 = vmatpush1.msra.mxu0 %v232
      %1561 = vmatprep.subr.mxu0 0.0
      %1562 = vmatpush1.msra.mxu0 %v231
      %1563 = vmatprep.subr.mxu0 0.0
      %1564 = vmatpush2.msra.mxu0 %v262
      %1565 = vmatprep.subr.mxu0 0.0
      %1566 = vmatpush2.msra.mxu0 %v261
      %1567 = vmatprep.subr.mxu0 0.0
      %1568 = vmatpush2.msra.mxu0 %v260
      %1569 = vmatprep.subr.mxu0 0.0
      %1570 = vmatpush2.msra.mxu0 %v259
      %1571 = vmatprep.subr.mxu0 0.0
      %1572 = vmatpush2.msra.mxu0 %v258
      %1573 = vmatprep.subr.mxu0 0.0
      %1574 = vmatpush2.msra.mxu0 %v257
      %1575 = vmatprep.subr.mxu0 0.0
      %1576 = vmatpush2.msra.mxu0 %v256
      %1577 = vmatprep.subr.mxu0 0.0
      %1578 = vmatpush2.msra.mxu0 %v255
      %1579 = vmatprep.subr.mxu0 0.0
      %1580 = vmatpush2.msra.mxu0 %v254
      %1581 = vmatprep.subr.mxu0 0.0
      %1582 = vmatpush2.msra.mxu0 %v253
      %1583 = vmatprep.subr.mxu0 0.0
      %1584 = vmatpush2.msra.mxu0 %v252
      %1585 = vmatprep.subr.mxu0 0.0
      %1586 = vmatpush2.msra.mxu0 %v251
      %1587 = vmatprep.subr.mxu0 0.0
      %1588 = vmatpush2.msra.mxu0 %v250
      %1589 = vmatprep.subr.mxu0 0.0
      %1590 = vmatpush2.msra.mxu0 %v249
      %1591 = vmatprep.subr.mxu0 0.0
      %1592 = vmatpush2.msra.mxu0 %v248
      %1593 = vmatprep.subr.mxu0 0.0
      %1594 = vmatpush2.msra.mxu0 %v247
      %1595 = vmatprep.mubr.f32.mxu0 %v1452
      %1596 = vmatmul.mubr.f32.gmra.mxu0 %v1442
      %v1597 = vpop.f32.mrf.mxu0
      %v1598 = vadd.f32 %v1528, %v1597
      %v1599 = vpop.f32.mrf.mxu0
      %1600 = vdwg.mxu0
      %1601 = vmatprep.subr.mxu0 0.0
      %1602 = vmatpush1.msra.mxu0 %v278
      %1603 = vmatprep.subr.mxu0 0.0
      %1604 = vmatpush1.msra.mxu0 %v277
      %1605 = vmatprep.subr.mxu0 0.0
      %1606 = vmatpush1.msra.mxu0 %v276
      %1607 = vmatprep.subr.mxu0 0.0
      %1608 = vmatpush1.msra.mxu0 %v275
      %1609 = vmatprep.subr.mxu0 0.0
      %1610 = vmatpush1.msra.mxu0 %v274
      %1611 = vmatprep.subr.mxu0 0.0
      %1612 = vmatpush1.msra.mxu0 %v273
      %1613 = vmatprep.subr.mxu0 0.0
      %1614 = vmatpush1.msra.mxu0 %v272
      %1615 = vmatprep.subr.mxu0 0.0
      %1616 = vmatpush1.msra.mxu0 %v271
      %1617 = vmatprep.subr.mxu0 0.0
      %1618 = vmatpush1.msra.mxu0 %v270
      %1619 = vmatprep.subr.mxu0 0.0
      %1620 = vmatpush1.msra.mxu0 %v269
      %1621 = vmatprep.subr.mxu0 0.0
      %1622 = vmatpush1.msra.mxu0 %v268
      %1623 = vmatprep.subr.mxu0 0.0
      %1624 = vmatpush1.msra.mxu0 %v267
      %1625 = vmatprep.subr.mxu0 0.0
      %1626 = vmatpush1.msra.mxu0 %v266
      %1627 = vmatprep.subr.mxu0 0.0
      %1628 = vmatpush1.msra.mxu0 %v265
      %1629 = vmatprep.subr.mxu0 0.0
      %1630 = vmatpush1.msra.mxu0 %v264
      %1631 = vmatprep.subr.mxu0 0.0
      %1632 = vmatpush1.msra.mxu0 %v263
      %1633 = vmatprep.subr.mxu0 0.0
      %1634 = vmatpush2.msra.mxu0 %v294
      %1635 = vmatprep.subr.mxu0 0.0
      %1636 = vmatpush2.msra.mxu0 %v293
      %1637 = vmatprep.subr.mxu0 0.0
      %1638 = vmatpush2.msra.mxu0 %v292
      %1639 = vmatprep.subr.mxu0 0.0
      %1640 = vmatpush2.msra.mxu0 %v291
      %1641 = vmatprep.subr.mxu0 0.0
      %1642 = vmatpush2.msra.mxu0 %v290
      %1643 = vmatprep.subr.mxu0 0.0
      %1644 = vmatpush2.msra.mxu0 %v289
      %1645 = vmatprep.subr.mxu0 0.0
      %1646 = vmatpush2.msra.mxu0 %v288
      %1647 = vmatprep.subr.mxu0 0.0
      %1648 = vmatpush2.msra.mxu0 %v287
      %1649 = vmatprep.subr.mxu0 0.0
      %1650 = vmatpush2.msra.mxu0 %v286
      %1651 = vmatprep.subr.mxu0 0.0
      %1652 = vmatpush2.msra.mxu0 %v285
      %1653 = vmatprep.subr.mxu0 0.0
      %1654 = vmatpush2.msra.mxu0 %v284
      %1655 = vmatprep.subr.mxu0 0.0
      %1656 = vmatpush2.msra.mxu0 %v283
      %1657 = vmatprep.subr.mxu0 0.0
      %1658 = vmatpush2.msra.mxu0 %v282
      %1659 = vmatprep.subr.mxu0 0.0
      %1660 = vmatpush2.msra.mxu0 %v281
      %1661 = vmatprep.subr.mxu0 0.0
      %1662 = vmatpush2.msra.mxu0 %v280
      %1663 = vmatprep.subr.mxu0 0.0
      %1664 = vmatpush2.msra.mxu0 %v279
      %1665 = vmatprep.mubr.f32.mxu0 %v1453
      %1666 = vmatmul.mubr.f32.gmra.mxu0 %v1443
      %v1667 = vpop.f32.mrf.mxu0
      %v1668 = vadd.f32 %v1598, %v1667
      %v1669 = vpop.f32.mrf.mxu0
      %1670 = vdwg.mxu0
      %1671 = vmatprep.subr.mxu0 0.0
      %1672 = vmatpush1.msra.mxu0 %v310
      %1673 = vmatprep.subr.mxu0 0.0
      %1674 = vmatpush1.msra.mxu0 %v309
      %1675 = vmatprep.subr.mxu0 0.0
      %1676 = vmatpush1.msra.mxu0 %v308
      %1677 = vmatprep.subr.mxu0 0.0
      %1678 = vmatpush1.msra.mxu0 %v307
      %1679 = vmatprep.subr.mxu0 0.0
      %1680 = vmatpush1.msra.mxu0 %v306
      %1681 = vmatprep.subr.mxu0 0.0
      %1682 = vmatpush1.msra.mxu0 %v305
      %1683 = vmatprep.subr.mxu0 0.0
      %1684 = vmatpush1.msra.mxu0 %v304
      %1685 = vmatprep.subr.mxu0 0.0
      %1686 = vmatpush1.msra.mxu0 %v303
      %1687 = vmatprep.subr.mxu0 0.0
      %1688 = vmatpush1.msra.mxu0 %v302
      %1689 = vmatprep.subr.mxu0 0.0
      %1690 = vmatpush1.msra.mxu0 %v301
      %1691 = vmatprep.subr.mxu0 0.0
      %1692 = vmatpush1.msra.mxu0 %v300
      %1693 = vmatprep.subr.mxu0 0.0
      %1694 = vmatpush1.msra.mxu0 %v299
      %1695 = vmatprep.subr.mxu0 0.0
      %1696 = vmatpush1.msra.mxu0 %v298
      %1697 = vmatprep.subr.mxu0 0.0
      %1698 = vmatpush1.msra.mxu0 %v297
      %1699 = vmatprep.subr.mxu0 0.0
      %1700 = vmatpush1.msra.mxu0 %v296
      %1701 = vmatprep.subr.mxu0 0.0
      %1702 = vmatpush1.msra.mxu0 %v295
      %1703 = vmatprep.subr.mxu0 0.0
      %1704 = vmatpush2.msra.mxu0 %v326
      %1705 = vmatprep.subr.mxu0 0.0
      %1706 = vmatpush2.msra.mxu0 %v325
      %1707 = vmatprep.subr.mxu0 0.0
      %1708 = vmatpush2.msra.mxu0 %v324
      %1709 = vmatprep.subr.mxu0 0.0
      %1710 = vmatpush2.msra.mxu0 %v323
      %1711 = vmatprep.subr.mxu0 0.0
      %1712 = vmatpush2.msra.mxu0 %v322
      %1713 = vmatprep.subr.mxu0 0.0
      %1714 = vmatpush2.msra.mxu0 %v321
      %1715 = vmatprep.subr.mxu0 0.0
      %1716 = vmatpush2.msra.mxu0 %v320
      %1717 = vmatprep.subr.mxu0 0.0
      %1718 = vmatpush2.msra.mxu0 %v319
      %1719 = vmatprep.subr.mxu0 0.0
      %1720 = vmatpush2.msra.mxu0 %v318
      %1721 = vmatprep.subr.mxu0 0.0
      %1722 = vmatpush2.msra.mxu0 %v317
      %1723 = vmatprep.subr.mxu0 0.0
      %1724 = vmatpush2.msra.mxu0 %v316
      %1725 = vmatprep.subr.mxu0 0.0
      %1726 = vmatpush2.msra.mxu0 %v315
      %1727 = vmatprep.subr.mxu0 0.0
      %1728 = vmatpush2.msra.mxu0 %v314
      %1729 = vmatprep.subr.mxu0 0.0
      %1730 = vmatpush2.msra.mxu0 %v313
      %1731 = vmatprep.subr.mxu0 0.0
      %1732 = vmatpush2.msra.mxu0 %v312
      %1733 = vmatprep.subr.mxu0 0.0
      %1734 = vmatpush2.msra.mxu0 %v311
      %1735 = vmatprep.mubr.f32.mxu0 %v1454
      %1736 = vmatmul.mubr.f32.gmra.mxu0 %v1444
      %v1737 = vpop.f32.mrf.mxu0
      %v1738 = vadd.f32 %v1668, %v1737
      %v1739 = vpop.f32.mrf.mxu0
      %1740 = vdwg.mxu0
      %1741 = vmatprep.subr.mxu0 0.0
      %1742 = vmatpush1.msra.mxu0 0.0
      %1743 = vmatprep.subr.mxu0 0.0
      %1744 = vmatpush1.msra.mxu0 0.0
      %1745 = vmatprep.subr.mxu0 0.0
      %1746 = vmatpush1.msra.mxu0 0.0
      %1747 = vmatprep.subr.mxu0 0.0
      %1748 = vmatpush1.msra.mxu0 0.0
      %1749 = vmatprep.subr.mxu0 0.0
      %1750 = vmatpush1.msra.mxu0 0.0
      %1751 = vmatprep.subr.mxu0 0.0
      %1752 = vmatpush1.msra.mxu0 0.0
      %1753 = vmatprep.subr.mxu0 0.0
      %1754 = vmatpush1.msra.mxu0 0.0
      %1755 = vmatprep.subr.mxu0 0.0
      %1756 = vmatpush1.msra.mxu0 %v354
      %1757 = vmatprep.subr.mxu0 0.0
      %1758 = vmatpush1.msra.mxu0 %v334
      %1759 = vmatprep.subr.mxu0 0.0
      %1760 = vmatpush1.msra.mxu0 %v333
      %1761 = vmatprep.subr.mxu0 0.0
      %1762 = vmatpush1.msra.mxu0 %v332
      %1763 = vmatprep.subr.mxu0 0.0
      %1764 = vmatpush1.msra.mxu0 %v331
      %1765 = vmatprep.subr.mxu0 0.0
      %1766 = vmatpush1.msra.mxu0 %v330
      %1767 = vmatprep.subr.mxu0 0.0
      %1768 = vmatpush1.msra.mxu0 %v329
      %1769 = vmatprep.subr.mxu0 0.0
      %1770 = vmatpush1.msra.mxu0 %v328
      %1771 = vmatprep.subr.mxu0 0.0
      %1772 = vmatpush1.msra.mxu0 %v327
      %1773 = vmatprep.subr.mxu0 0.0
      %1774 = vmatpush2.msra.mxu0 0.0
      %1775 = vmatprep.subr.mxu0 0.0
      %1776 = vmatpush2.msra.mxu0 0.0
      %1777 = vmatprep.subr.mxu0 0.0
      %1778 = vmatpush2.msra.mxu0 0.0
      %1779 = vmatprep.subr.mxu0 0.0
      %1780 = vmatpush2.msra.mxu0 0.0
      %1781 = vmatprep.subr.mxu0 0.0
      %1782 = vmatpush2.msra.mxu0 0.0
      %1783 = vmatprep.subr.mxu0 0.0
      %1784 = vmatpush2.msra.mxu0 0.0
      %1785 = vmatprep.subr.mxu0 0.0
      %1786 = vmatpush2.msra.mxu0 0.0
      %1787 = vmatprep.subr.mxu0 0.0
      %1788 = vmatpush2.msra.mxu0 0.0
      %1789 = vmatprep.subr.mxu0 0.0
      %1790 = vmatpush2.msra.mxu0 0.0
      %1791 = vmatprep.subr.mxu0 0.0
      %1792 = vmatpush2.msra.mxu0 0.0
      %1793 = vmatprep.subr.mxu0 0.0
      %1794 = vmatpush2.msra.mxu0 0.0
      %1795 = vmatprep.subr.mxu0 0.0
      %1796 = vmatpush2.msra.mxu0 0.0
      %1797 = vmatprep.subr.mxu0 0.0
      %1798 = vmatpush2.msra.mxu0 0.0
      %1799 = vmatprep.subr.mxu0 0.0
      %1800 = vmatpush2.msra.mxu0 0.0
      %1801 = vmatprep.subr.mxu0 0.0
      %1802 = vmatpush2.msra.mxu0 0.0
      %1803 = vmatprep.subr.mxu0 0.0
      %1804 = vmatpush2.msra.mxu0 0.0
      %1805 = vmatprep.mubr.f32.mxu0 0.0
      %1806 = vmatmul.mubr.f32.gmra.mxu0 %v1459
      %v1807 = vpop.f32.mrf.mxu0
      %v1808 = vadd.f32 %v1738, %v1807
      %v1809 = vpop.f32.mrf.mxu0
      %1810 = vdwg.mxu0
      %v1811 = vmul.f32 %v189, %v194
      %v1812 = vmul.f32 %v190, %v195
      %v1813 = vmul.f32 %v191, %v196
      %v1814 = vmul.f32 %v192, %v197
      %v1815 = vmul.f32 %v193, %v198
      %v1821 = vcombine.high %v1811, %v1811
      %v1822 = vcombine.high %v1812, %v1812
      %v1823 = vcombine.high %v1813, %v1813
      %v1824 = vcombine.high %v1814, %v1814
      %v1829 = vsel %vm349, %v1815, 0
      %1831 = vmatprep.subr.mxu0 0.0
      %1832 = vmatpush1.msra.mxu0 %v214
      %1833 = vmatprep.subr.mxu0 0.0
      %1834 = vmatpush1.msra.mxu0 %v213
      %1835 = vmatprep.subr.mxu0 0.0
      %1836 = vmatpush1.msra.mxu0 %v212
      %1837 = vmatprep.subr.mxu0 0.0
      %1838 = vmatpush1.msra.mxu0 %v211
      %1839 = vmatprep.subr.mxu0 0.0
      %1840 = vmatpush1.msra.mxu0 %v210
      %1841 = vmatprep.subr.mxu0 0.0
      %1842 = vmatpush1.msra.mxu0 %v209
      %1843 = vmatprep.subr.mxu0 0.0
      %1844 = vmatpush1.msra.mxu0 %v208
      %1845 = vmatprep.subr.mxu0 0.0
      %1846 = vmatpush1.msra.mxu0 %v207
      %1847 = vmatprep.subr.mxu0 0.0
      %1848 = vmatpush1.msra.mxu0 %v206
      %1849 = vmatprep.subr.mxu0 0.0
      %1850 = vmatpush1.msra.mxu0 %v205
      %1851 = vmatprep.subr.mxu0 0.0
      %1852 = vmatpush1.msra.mxu0 %v204
      %1853 = vmatprep.subr.mxu0 0.0
      %1854 = vmatpush1.msra.mxu0 %v203
      %1855 = vmatprep.subr.mxu0 0.0
      %1856 = vmatpush1.msra.mxu0 %v202
      %1857 = vmatprep.subr.mxu0 0.0
      %1858 = vmatpush1.msra.mxu0 %v201
      %1859 = vmatprep.subr.mxu0 0.0
      %1860 = vmatpush1.msra.mxu0 %v200
      %1861 = vmatprep.subr.mxu0 0.0
      %1862 = vmatpush1.msra.mxu0 %v199
      %1863 = vmatprep.subr.mxu0 0.0
      %1864 = vmatpush2.msra.mxu0 %v230
      %1865 = vmatprep.subr.mxu0 0.0
      %1866 = vmatpush2.msra.mxu0 %v229
      %1867 = vmatprep.subr.mxu0 0.0
      %1868 = vmatpush2.msra.mxu0 %v228
      %1869 = vmatprep.subr.mxu0 0.0
      %1870 = vmatpush2.msra.mxu0 %v227
      %1871 = vmatprep.subr.mxu0 0.0
      %1872 = vmatpush2.msra.mxu0 %v226
      %1873 = vmatprep.subr.mxu0 0.0
      %1874 = vmatpush2.msra.mxu0 %v225
      %1875 = vmatprep.subr.mxu0 0.0
      %1876 = vmatpush2.msra.mxu0 %v224
      %1877 = vmatprep.subr.mxu0 0.0
      %1878 = vmatpush2.msra.mxu0 %v223
      %1879 = vmatprep.subr.mxu0 0.0
      %1880 = vmatpush2.msra.mxu0 %v222
      %1881 = vmatprep.subr.mxu0 0.0
      %1882 = vmatpush2.msra.mxu0 %v221
      %1883 = vmatprep.subr.mxu0 0.0
      %1884 = vmatpush2.msra.mxu0 %v220
      %1885 = vmatprep.subr.mxu0 0.0
      %1886 = vmatpush2.msra.mxu0 %v219
      %1887 = vmatprep.subr.mxu0 0.0
      %1888 = vmatpush2.msra.mxu0 %v218
      %1889 = vmatprep.subr.mxu0 0.0
      %1890 = vmatpush2.msra.mxu0 %v217
      %1891 = vmatprep.subr.mxu0 0.0
      %1892 = vmatpush2.msra.mxu0 %v216
      %1893 = vmatprep.subr.mxu0 0.0
      %1894 = vmatpush2.msra.mxu0 %v215
      %1895 = vmatprep.mubr.f32.mxu0 %v1821
      %1896 = vmatmul.mubr.f32.gmra.mxu0 %v1811
      %v1897 = vpop.f32.mrf.mxu0
      %v1898 = vadd.f32 0.0, %v1897
      %v1899 = vpop.f32.mrf.mxu0
      %1900 = vdwg.mxu0
      %1901 = vmatprep.subr.mxu0 0.0
      %1902 = vmatpush1.msra.mxu0 %v246
      %1903 = vmatprep.subr.mxu0 0.0
      %1904 = vmatpush1.msra.mxu0 %v245
      %1905 = vmatprep.subr.mxu0 0.0
      %1906 = vmatpush1.msra.mxu0 %v244
      %1907 = vmatprep.subr.mxu0 0.0
      %1908 = vmatpush1.msra.mxu0 %v243
      %1909 = vmatprep.subr.mxu0 0.0
      %1910 = vmatpush1.msra.mxu0 %v242
      %1911 = vmatprep.subr.mxu0 0.0
      %1912 = vmatpush1.msra.mxu0 %v241
      %1913 = vmatprep.subr.mxu0 0.0
      %1914 = vmatpush1.msra.mxu0 %v240
      %1915 = vmatprep.subr.mxu0 0.0
      %1916 = vmatpush1.msra.mxu0 %v239
      %1917 = vmatprep.subr.mxu0 0.0
      %1918 = vmatpush1.msra.mxu0 %v238
      %1919 = vmatprep.subr.mxu0 0.0
      %1920 = vmatpush1.msra.mxu0 %v237
      %1921 = vmatprep.subr.mxu0 0.0
      %1922 = vmatpush1.msra.mxu0 %v236
      %1923 = vmatprep.subr.mxu0 0.0
      %1924 = vmatpush1.msra.mxu0 %v235
      %1925 = vmatprep.subr.mxu0 0.0
      %1926 = vmatpush1.msra.mxu0 %v234
      %1927 = vmatprep.subr.mxu0 0.0
      %1928 = vmatpush1.msra.mxu0 %v233
      %1929 = vmatprep.subr.mxu0 0.0
      %1930 = vmatpush1.msra.mxu0 %v232
      %1931 = vmatprep.subr.mxu0 0.0
      %1932 = vmatpush1.msra.mxu0 %v231
      %1933 = vmatprep.subr.mxu0 0.0
      %1934 = vmatpush2.msra.mxu0 %v262
      %1935 = vmatprep.subr.mxu0 0.0
      %1936 = vmatpush2.msra.mxu0 %v261
      %1937 = vmatprep.subr.mxu0 0.0
      %1938 = vmatpush2.msra.mxu0 %v260
      %1939 = vmatprep.subr.mxu0 0.0
      %1940 = vmatpush2.msra.mxu0 %v259
      %1941 = vmatprep.subr.mxu0 0.0
      %1942 = vmatpush2.msra.mxu0 %v258
      %1943 = vmatprep.subr.mxu0 0.0
      %1944 = vmatpush2.msra.mxu0 %v257
      %1945 = vmatprep.subr.mxu0 0.0
      %1946 = vmatpush2.msra.mxu0 %v256
      %1947 = vmatprep.subr.mxu0 0.0
      %1948 = vmatpush2.msra.mxu0 %v255
      %1949 = vmatprep.subr.mxu0 0.0
      %1950 = vmatpush2.msra.mxu0 %v254
      %1951 = vmatprep.subr.mxu0 0.0
      %1952 = vmatpush2.msra.mxu0 %v253
      %1953 = vmatprep.subr.mxu0 0.0
      %1954 = vmatpush2.msra.mxu0 %v252
      %1955 = vmatprep.subr.mxu0 0.0
      %1956 = vmatpush2.msra.mxu0 %v251
      %1957 = vmatprep.subr.mxu0 0.0
      %1958 = vmatpush2.msra.mxu0 %v250
      %1959 = vmatprep.subr.mxu0 0.0
      %1960 = vmatpush2.msra.mxu0 %v249
      %1961 = vmatprep.subr.mxu0 0.0
      %1962 = vmatpush2.msra.mxu0 %v248
      %1963 = vmatprep.subr.mxu0 0.0
      %1964 = vmatpush2.msra.mxu0 %v247
      %1965 = vmatprep.mubr.f32.mxu0 %v1822
      %1966 = vmatmul.mubr.f32.gmra.mxu0 %v1812
      %v1967 = vpop.f32.mrf.mxu0
      %v1968 = vadd.f32 %v1898, %v1967
      %v1969 = vpop.f32.mrf.mxu0
      %1970 = vdwg.mxu0
      %1971 = vmatprep.subr.mxu0 0.0
      %1972 = vmatpush1.msra.mxu0 %v278
      %1973 = vmatprep.subr.mxu0 0.0
      %1974 = vmatpush1.msra.mxu0 %v277
      %1975 = vmatprep.subr.mxu0 0.0
      %1976 = vmatpush1.msra.mxu0 %v276
      %1977 = vmatprep.subr.mxu0 0.0
      %1978 = vmatpush1.msra.mxu0 %v275
      %1979 = vmatprep.subr.mxu0 0.0
      %1980 = vmatpush1.msra.mxu0 %v274
      %1981 = vmatprep.subr.mxu0 0.0
      %1982 = vmatpush1.msra.mxu0 %v273
      %1983 = vmatprep.subr.mxu0 0.0
      %1984 = vmatpush1.msra.mxu0 %v272
      %1985 = vmatprep.subr.mxu0 0.0
      %1986 = vmatpush1.msra.mxu0 %v271
      %1987 = vmatprep.subr.mxu0 0.0
      %1988 = vmatpush1.msra.mxu0 %v270
      %1989 = vmatprep.subr.mxu0 0.0
      %1990 = vmatpush1.msra.mxu0 %v269
      %1991 = vmatprep.subr.mxu0 0.0
      %1992 = vmatpush1.msra.mxu0 %v268
      %1993 = vmatprep.subr.mxu0 0.0
      %1994 = vmatpush1.msra.mxu0 %v267
      %1995 = vmatprep.subr.mxu0 0.0
      %1996 = vmatpush1.msra.mxu0 %v266
      %1997 = vmatprep.subr.mxu0 0.0
      %1998 = vmatpush1.msra.mxu0 %v265
      %1999 = vmatprep.subr.mxu0 0.0
      %2000 = vmatpush1.msra.mxu0 %v264
      %2001 = vmatprep.subr.mxu0 0.0
      %2002 = vmatpush1.msra.mxu0 %v263
      %2003 = vmatprep.subr.mxu0 0.0
      %2004 = vmatpush2.msra.mxu0 %v294
      %2005 = vmatprep.subr.mxu0 0.0
      %2006 = vmatpush2.msra.mxu0 %v293
      %2007 = vmatprep.subr.mxu0 0.0
      %2008 = vmatpush2.msra.mxu0 %v292
      %2009 = vmatprep.subr.mxu0 0.0
      %2010 = vmatpush2.msra.mxu0 %v291
      %2011 = vmatprep.subr.mxu0 0.0
      %2012 = vmatpush2.msra.mxu0 %v290
      %2013 = vmatprep.subr.mxu0 0.0
      %2014 = vmatpush2.msra.mxu0 %v289
      %2015 = vmatprep.subr.mxu0 0.0
      %2016 = vmatpush2.msra.mxu0 %v288
      %2017 = vmatprep.subr.mxu0 0.0
      %2018 = vmatpush2.msra.mxu0 %v287
      %2019 = vmatprep.subr.mxu0 0.0
      %2020 = vmatpush2.msra.mxu0 %v286
      %2021 = vmatprep.subr.mxu0 0.0
      %2022 = vmatpush2.msra.mxu0 %v285
      %2023 = vmatprep.subr.mxu0 0.0
      %2024 = vmatpush2.msra.mxu0 %v284
      %2025 = vmatprep.subr.mxu0 0.0
      %2026 = vmatpush2.msra.mxu0 %v283
      %2027 = vmatprep.subr.mxu0 0.0
      %2028 = vmatpush2.msra.mxu0 %v282
      %2029 = vmatprep.subr.mxu0 0.0
      %2030 = vmatpush2.msra.mxu0 %v281
      %2031 = vmatprep.subr.mxu0 0.0
      %2032 = vmatpush2.msra.mxu0 %v280
      %2033 = vmatprep.subr.mxu0 0.0
      %2034 = vmatpush2.msra.mxu0 %v279
      %2035 = vmatprep.mubr.f32.mxu0 %v1823
      %2036 = vmatmul.mubr.f32.gmra.mxu0 %v1813
      %v2037 = vpop.f32.mrf.mxu0
      %v2038 = vadd.f32 %v1968, %v2037
      %v2039 = vpop.f32.mrf.mxu0
      %2040 = vdwg.mxu0
      %2041 = vmatprep.subr.mxu0 0.0
      %2042 = vmatpush1.msra.mxu0 %v310
      %2043 = vmatprep.subr.mxu0 0.0
      %2044 = vmatpush1.msra.mxu0 %v309
      %2045 = vmatprep.subr.mxu0 0.0
      %2046 = vmatpush1.msra.mxu0 %v308
      %2047 = vmatprep.subr.mxu0 0.0
      %2048 = vmatpush1.msra.mxu0 %v307
      %2049 = vmatprep.subr.mxu0 0.0
      %2050 = vmatpush1.msra.mxu0 %v306
      %2051 = vmatprep.subr.mxu0 0.0
      %2052 = vmatpush1.msra.mxu0 %v305
      %2053 = vmatprep.subr.mxu0 0.0
      %2054 = vmatpush1.msra.mxu0 %v304
      %2055 = vmatprep.subr.mxu0 0.0
      %2056 = vmatpush1.msra.mxu0 %v303
      %2057 = vmatprep.subr.mxu0 0.0
      %2058 = vmatpush1.msra.mxu0 %v302
      %2059 = vmatprep.subr.mxu0 0.0
      %2060 = vmatpush1.msra.mxu0 %v301
      %2061 = vmatprep.subr.mxu0 0.0
      %2062 = vmatpush1.msra.mxu0 %v300
      %2063 = vmatprep.subr.mxu0 0.0
      %2064 = vmatpush1.msra.mxu0 %v299
      %2065 = vmatprep.subr.mxu0 0.0
      %2066 = vmatpush1.msra.mxu0 %v298
      %2067 = vmatprep.subr.mxu0 0.0
      %2068 = vmatpush1.msra.mxu0 %v297
      %2069 = vmatprep.subr.mxu0 0.0
      %2070 = vmatpush1.msra.mxu0 %v296
      %2071 = vmatprep.subr.mxu0 0.0
      %2072 = vmatpush1.msra.mxu0 %v295
      %2073 = vmatprep.subr.mxu0 0.0
      %2074 = vmatpush2.msra.mxu0 %v326
      %2075 = vmatprep.subr.mxu0 0.0
      %2076 = vmatpush2.msra.mxu0 %v325
      %2077 = vmatprep.subr.mxu0 0.0
      %2078 = vmatpush2.msra.mxu0 %v324
      %2079 = vmatprep.subr.mxu0 0.0
      %2080 = vmatpush2.msra.mxu0 %v323
      %2081 = vmatprep.subr.mxu0 0.0
      %2082 = vmatpush2.msra.mxu0 %v322
      %2083 = vmatprep.subr.mxu0 0.0
      %2084 = vmatpush2.msra.mxu0 %v321
      %2085 = vmatprep.subr.mxu0 0.0
      %2086 = vmatpush2.msra.mxu0 %v320
      %2087 = vmatprep.subr.mxu0 0.0
      %2088 = vmatpush2.msra.mxu0 %v319
      %2089 = vmatprep.subr.mxu0 0.0
      %2090 = vmatpush2.msra.mxu0 %v318
      %2091 = vmatprep.subr.mxu0 0.0
      %2092 = vmatpush2.msra.mxu0 %v317
      %2093 = vmatprep.subr.mxu0 0.0
      %2094 = vmatpush2.msra.mxu0 %v316
      %2095 = vmatprep.subr.mxu0 0.0
      %2096 = vmatpush2.msra.mxu0 %v315
      %2097 = vmatprep.subr.mxu0 0.0
      %2098 = vmatpush2.msra.mxu0 %v314
      %2099 = vmatprep.subr.mxu0 0.0
      %2100 = vmatpush2.msra.mxu0 %v313
      %2101 = vmatprep.subr.mxu0 0.0
      %2102 = vmatpush2.msra.mxu0 %v312
      %2103 = vmatprep.subr.mxu0 0.0
      %2104 = vmatpush2.msra.mxu0 %v311
      %2105 = vmatprep.mubr.f32.mxu0 %v1824
      %2106 = vmatmul.mubr.f32.gmra.mxu0 %v1814
      %v2107 = vpop.f32.mrf.mxu0
      %v2108 = vadd.f32 %v2038, %v2107
      %v2109 = vpop.f32.mrf.mxu0
      %2110 = vdwg.mxu0
      %2111 = vmatprep.subr.mxu0 0.0
      %2112 = vmatpush1.msra.mxu0 0.0
      %2113 = vmatprep.subr.mxu0 0.0
      %2114 = vmatpush1.msra.mxu0 0.0
      %2115 = vmatprep.subr.mxu0 0.0
      %2116 = vmatpush1.msra.mxu0 0.0
      %2117 = vmatprep.subr.mxu0 0.0
      %2118 = vmatpush1.msra.mxu0 0.0
      %2119 = vmatprep.subr.mxu0 0.0
      %2120 = vmatpush1.msra.mxu0 0.0
      %2121 = vmatprep.subr.mxu0 0.0
      %2122 = vmatpush1.msra.mxu0 0.0
      %2123 = vmatprep.subr.mxu0 0.0
      %2124 = vmatpush1.msra.mxu0 0.0
      %2125 = vmatprep.subr.mxu0 0.0
      %2126 = vmatpush1.msra.mxu0 %v354
      %2127 = vmatprep.subr.mxu0 0.0
      %2128 = vmatpush1.msra.mxu0 %v334
      %2129 = vmatprep.subr.mxu0 0.0
      %2130 = vmatpush1.msra.mxu0 %v333
      %2131 = vmatprep.subr.mxu0 0.0
      %2132 = vmatpush1.msra.mxu0 %v332
      %2133 = vmatprep.subr.mxu0 0.0
      %2134 = vmatpush1.msra.mxu0 %v331
      %2135 = vmatprep.subr.mxu0 0.0
      %2136 = vmatpush1.msra.mxu0 %v330
      %2137 = vmatprep.subr.mxu0 0.0
      %2138 = vmatpush1.msra.mxu0 %v329
      %2139 = vmatprep.subr.mxu0 0.0
      %2140 = vmatpush1.msra.mxu0 %v328
      %2141 = vmatprep.subr.mxu0 0.0
      %2142 = vmatpush1.msra.mxu0 %v327
      %2143 = vmatprep.subr.mxu0 0.0
      %2144 = vmatpush2.msra.mxu0 0.0
      %2145 = vmatprep.subr.mxu0 0.0
      %2146 = vmatpush2.msra.mxu0 0.0
      %2147 = vmatprep.subr.mxu0 0.0
      %2148 = vmatpush2.msra.mxu0 0.0
      %2149 = vmatprep.subr.mxu0 0.0
      %2150 = vmatpush2.msra.mxu0 0.0
      %2151 = vmatprep.subr.mxu0 0.0
      %2152 = vmatpush2.msra.mxu0 0.0
      %2153 = vmatprep.subr.mxu0 0.0
      %2154 = vmatpush2.msra.mxu0 0.0
      %2155 = vmatprep.subr.mxu0 0.0
      %2156 = vmatpush2.msra.mxu0 0.0
      %2157 = vmatprep.subr.mxu0 0.0
      %2158 = vmatpush2.msra.mxu0 0.0
      %2159 = vmatprep.subr.mxu0 0.0
      %2160 = vmatpush2.msra.mxu0 0.0
      %2161 = vmatprep.subr.mxu0 0.0
      %2162 = vmatpush2.msra.mxu0 0.0
      %2163 = vmatprep.subr.mxu0 0.0
      %2164 = vmatpush2.msra.mxu0 0.0
      %2165 = vmatprep.subr.mxu0 0.0
      %2166 = vmatpush2.msra.mxu0 0.0
      %2167 = vmatprep.subr.mxu0 0.0
      %2168 = vmatpush2.msra.mxu0 0.0
      %2169 = vmatprep.subr.mxu0 0.0
      %2170 = vmatpush2.msra.mxu0 0.0
      %2171 = vmatprep.subr.mxu0 0.0
      %2172 = vmatpush2.msra.mxu0 0.0
      %2173 = vmatprep.subr.mxu0 0.0
      %2174 = vmatpush2.msra.mxu0 0.0
      %2175 = vmatprep.mubr.f32.mxu0 0.0
      %2176 = vmatmul.mubr.f32.gmra.mxu0 %v1829
      %v2177 = vpop.f32.mrf.mxu0
      %v2178 = vadd.f32 %v2108, %v2177
      %v2179 = vpop.f32.mrf.mxu0
      %2180 = vdwg.mxu0
      %v2181 = vmul.f32 %v703, %v703
      %v2182 = vsub.f32 %v1438, %v2181
      %v2183 = vmul.f32 %v1068, %v1068
      %v2184 = vsub.f32 %v1808, %v2183
      %v2185 = vmul.f32 %v703, %v1068
      %v2186 = vsub.f32 %v2178, %v2185
      %v2187 = vmul.f32 %v703, 2.0
      %v2188 = vmul.f32 %v2187, %v1068
      %v2189 = vadd.f32 %v2188, 0.0001
      %v2190 = vmul.f32 %v2186, 2.0
      %v2191 = vadd.f32 %v2190, 0.0009
      %v2192 = vmul.f32 %v2189, %v2191
      %v2193 = vadd.f32 %v2181, %v2183
      %v2194 = vadd.f32 %v2193, 0.0001
      %v2195 = vadd.f32 %v2182, %v2184
      %v2196 = vadd.f32 %v2195, 0.0009
      %v2197 = vmul.f32 %v2194, %v2196
      %v2198 = vrcp.pop %v2197
      %v2199 = vmul.f32 %v2192, %v2198
      %vm2200 = vcmask 68608
      %v2201 = vsel %vm2200, %v2199, 0.0
      %2202 = vadd.xlane.f32.xlu0 %v2201
      %v2203 = vpop.xlane.xlu0 %2202
      %v2204 = vrot.slane %v2203, 4
      %v2205 = vadd.f32 %v2203, %v2204
      %v2206 = vrot.slane %v2205, 2
      %v2207 = vadd.f32 %v2205, %v2206
      %v2208 = vrot.slane %v2207, 1
      %v2209 = vadd.f32 %v2207, %v2208
      %s2210 = vtos %v2209
      %v2211 = vstv %s2210
      %vm2212 = vcmask 7168
      %2213 = vst.msk [vmem:[%s188] sm:$0xff] %vm2212, %v2211
      %p2214 = scmp.lt.s32.totalorder %s14, 1
      %s2215 = scalar_select %p2214, %s14, 1
      %s2216 = smul.addr %s2215, 8
      %s2217 = scalar_lea.vmem %s3, %s2216
      // Predicated region
      $region33: #{tpu_custom_call.1} parent=31 // pred_check
        %p2218 = pneg %p105
      $region34: #{tpu_custom_call.1} parent=31 // pred_check_branch
        %2220 = sbr.rel (%p2218) target = $region36
      $region35: #{tpu_custom_call.1} parent=31 // pred_region
        _
      $region36: #{tpu_custom_call.1} parent=31 // pred_fallthru
        _
    $region32: #{tpu_custom_call.1} parent=5 // pred_fallthru
      _
    %p2221 = scmp.le.s32.totalorder 2, %s9
    // Predicated region
    $region37: #{tpu_custom_call.1} parent=5 // pred_check
      %p2222 = pneg %p2221
    $region38: #{tpu_custom_call.1} parent=5 // pred_check_branch
      %2224 = sbr.rel (%p2222) target = $region40
    $region39: #{tpu_custom_call.1} parent=5 // pred_region
      %s2225 = ssub.s32 %s9, 2
      // Predicated region
      $region41: #{tpu_custom_call.1} parent=39 // pred_check
        %p2226 = pneg %p111
      $region42: #{tpu_custom_call.1} parent=39 // pred_check_branch
        %2228 = sbr.rel (%p2226) target = $region44
      $region43: #{tpu_custom_call.1} parent=39 // pred_region
        %p2229 = scmp.lt.s32.totalorder %s15, 1
        %s2230 = scalar_select %p2229, %s15, 1
        %s2231 = smul.addr %s2230, 8
        %s2232 = scalar_lea.vmem %s3, %s2231
      $region44: #{tpu_custom_call.1} parent=39 // pred_fallthru
        _
    $region40: #{tpu_custom_call.1} parent=5 // pred_fallthru
      _
  $region6: #{tpu_custom_call.1} parent=0 // loop_footer
    %s13 = sadd.s32 1, %s9
  $region7: #{tpu_custom_call.1} parent=0 // loop_footer_branch
    %8 = sbr.rel target = $region3
  $region8: #{tpu_custom_call.1} parent=0 // loop_exit
    _

</llo_original>
